<compile_context>
chip_gen: v5e
topology: v5e:2x2
jax: 0.10.0
libtpu: 0.0.40
codegen_flags: <defaults>
</compile_context>

<pallas_src>
import jax
import jax.numpy as jnp
import numpy as np
from jax.experimental import pallas as pl
from jax.experimental.pallas import tpu as pltpu

_GRAV = 9.81


# --------------------------------------------------------------------------
# Pallas kernel: the whole controller forward pass for one lane-tile of
# B controller instances.  All math is elementwise over the lane axis
# (no MXU, no cross-lane ops).
# --------------------------------------------------------------------------
def _controller_kernel(gains_ref, inertia_ref, cs_ref, sp_ref,
                       thrust_ref, torque_ref, rd_ref, desw_ref):
    cs = cs_ref[...]        # (13, TB) current states, field-major
    sp = sp_ref[...]        # (13, TB) setpoints, field-major

    def row(a, i):          # (1, TB) lane vector holding field i of all instances
        return a[i:i + 1, :]

    # ---- unpack current state / setpoint -------------------------------------
    currPos = [row(cs, i) for i in range(0, 3)]
    currVel = [row(cs, i) for i in range(3, 6)]
    qw, qx, qy, qz = (row(cs, i) for i in (6, 7, 8, 9))
    currW = [row(cs, i) for i in range(10, 13)]

    desPos = [row(sp, i) for i in range(0, 3)]
    desVel = [row(sp, i) for i in range(3, 6)]
    desAcc = [row(sp, i) for i in range(6, 9)]
    desJerk = [row(sp, i) for i in range(9, 12)]
    desYaw = row(sp, 12)

    # ---- quaternion (x,y,z,w) -> rotation matrix (roma.unitquat_to_rotmat) ---
    R = [
        [1.0 - 2.0 * (qy * qy + qz * qz), 2.0 * (qx * qy - qz * qw), 2.0 * (qx * qz + qy * qw)],
        [2.0 * (qx * qy + qz * qw), 1.0 - 2.0 * (qx * qx + qz * qz), 2.0 * (qy * qz - qx * qw)],
        [2.0 * (qx * qz - qy * qw), 2.0 * (qy * qz + qx * qw), 1.0 - 2.0 * (qx * qx + qy * qy)],
    ]
    Rcol = [[R[0][c], R[1][c], R[2][c]] for c in range(3)]   # columns of R

    def dot3(a, b):
        return a[0] * b[0] + a[1] * b[1] + a[2] * b[2]

    def cross3(a, b):
        return [a[1] * b[2] - a[2] * b[1],
                a[2] * b[0] - a[0] * b[2],
                a[0] * b[1] - a[1] * b[0]]

    # ---- thrust (gains lifted from SMEM at first use) -------------------------
    kp = gains_ref[0]
    kv = gains_ref[1]
    m = gains_ref[4]

    ep = [currPos[k] - desPos[k] for k in range(3)]
    ev = [currVel[k] - desVel[k] for k in range(3)]
    refAcc = [desAcc[0], desAcc[1], desAcc[2] + _GRAV]
    FdI = [refAcc[k] - kp * ep[k] - kv * ev[k] for k in range(3)]
    thrust = m * dot3(FdI, Rcol[2])                      # m * FdI^T (R e3)

    # ---- desired attitude Rd = [xdes | ydes | zdes] ---------------------------
    n2_fd = dot3(FdI, FdI)
    has_fd = n2_fd > 0.0
    inv_fd = jax.lax.rsqrt(jnp.where(has_fd, n2_fd, 1.0))
    e3 = (0.0, 0.0, 1.0)
    zdes = [jnp.where(has_fd, FdI[k] * inv_fd, e3[k]) for k in range(3)]

    xcdes = [jnp.cos(desYaw), jnp.sin(desYaw), jnp.zeros_like(desYaw)]
    zxc = cross3(zdes, xcdes)                            # hat(zdes) @ xcdes
    n2_zx = dot3(zxc, zxc)
    has_zx = n2_zx > 0.0
    inv_zx = jax.lax.rsqrt(jnp.where(has_zx, n2_zx, 1.0))
    e2 = (0.0, 1.0, 0.0)
    ydes = [jnp.where(has_zx, zxc[k] * inv_zx, e2[k]) for k in range(3)]
    xdes = cross3(ydes, zdes)

    # ---- attitude error er = 0.5 * vee(Rd^T R - R^T Rd) -----------------------
    # R^T Rd = (Rd^T R)^T, so only 6 off-diagonal entries of M = Rd^T R are needed.
    m21 = dot3(zdes, Rcol[1])
    m12 = dot3(ydes, Rcol[2])
    m02 = dot3(xdes, Rcol[2])
    m20 = dot3(zdes, Rcol[0])
    m10 = dot3(ydes, Rcol[0])
    m01 = dot3(xdes, Rcol[1])
    er = [0.5 * (m21 - m12), 0.5 * (m02 - m20), 0.5 * (m10 - m01)]

    # ---- desired angular velocity (Mellinger & Kumar eq. 7) -------------------
    t_zero = thrust == 0.0
    coef = jnp.where(t_zero, 0.0, m / jnp.where(t_zero, 1.0, thrust))  # exact divide
    zj = dot3(zdes, desJerk)                             # zb^T desJerk (zb = Rd[:,2])
    hw = [coef * (desJerk[k] - zj * zdes[k]) for k in range(3)]
    p = -dot3(hw, ydes)
    q = dot3(hw, xdes)
    desW = [p, q, jnp.zeros_like(p)]                     # r = 0

    # ---- angular-velocity error & torque ---------------------------------------
    # desW[2] == 0  =>  Rd @ desW = p*xdes + q*ydes
    v1 = [p * xdes[k] + q * ydes[k] for k in range(3)]
    v2 = [R[0][k] * v1[0] + R[1][k] * v1[1] + R[2][k] * v1[2] for k in range(3)]  # R^T v1
    ew = [currW[k] - v2[k] for k in range(3)]

    kw = gains_ref[2]
    kr = gains_ref[3]
    Imat = [[inertia_ref[r, c] for c in range(3)] for r in range(3)]
    Iw = [dot3(Imat[r], currW) for r in range(3)]        # I @ w
    gyro = cross3(currW, Iw)                             # w x (I w)
    w3 = cross3(currW, v2)                               # hat(w) R^T Rd desW
    w4 = [dot3(Imat[r], w3) for r in range(3)]           # I @ (...)
    torque = [-kr * er[k] - kw * ew[k] + gyro[k] - w4[k] for k in range(3)]

    # ---- outputs: direct per-row lane-vector stores (no packing tree) ----------
    thrust_ref[...] = thrust
    for k in range(3):
        torque_ref[k:k + 1, :] = torque[k]
        desw_ref[k:k + 1, :] = desW[k]
    Rdcols = [xdes, ydes, zdes]                          # Rd[r][c] = Rdcols[c][r]
    for r in range(3):
        for c in range(3):
            rd_ref[3 * r + c:3 * r + c + 1, :] = Rdcols[c][r]


# --------------------------------------------------------------------------
# Batched wrapper: B controller instances, batch along the lane axis.
#   current_states: (13, B)  [x,y,z, vx,vy,vz, qw,qx,qy,qz, wx,wy,wz]
#   setpoints:      (13, B)  [x,y,z, vx,vy,vz, ax,ay,az, jx,jy,jz, yaw]
# Returns: thrust (1, B), torque (3, B), Rd (9, B) row-major, desW (3, B).
# --------------------------------------------------------------------------
def lee_controller_pallas(current_states, setpoints, kp, kv, kw, kr, m, inertia):
    f32 = jnp.float32
    current_states = current_states.astype(f32)
    setpoints = setpoints.astype(f32)
    B = current_states.shape[1]

    gains = jnp.array([kp, kv, kw, kr, m], f32)          # (5,)  -> SMEM
    inertia = jnp.asarray(inertia, f32).reshape(3, 3)    # (3,3) -> SMEM

    lane_tile = B if B <= 128 else 128
    assert B % lane_tile == 0, "batch must be <=128 or a multiple of 128"
    grid = (B // lane_tile,)

    smem_spec = pl.BlockSpec(memory_space=pltpu.MemorySpace.SMEM)

    def lane_spec(rows):
        return pl.BlockSpec((rows, lane_tile), lambda i: (0, i))

    out_shape = (jax.ShapeDtypeStruct((1, B), f32),      # thrust
                 jax.ShapeDtypeStruct((3, B), f32),      # torque
                 jax.ShapeDtypeStruct((9, B), f32),      # Rd (row-major)
                 jax.ShapeDtypeStruct((3, B), f32))      # desW

    return pl.pallas_call(
        _controller_kernel,
        out_shape=out_shape,
        grid=grid,
        in_specs=[smem_spec, smem_spec, lane_spec(13), lane_spec(13)],
        out_specs=(lane_spec(1), lane_spec(3), lane_spec(9), lane_spec(3)),
        compiler_params=pltpu.CompilerParams(
            dimension_semantics=("parallel",)),
    )(gains, inertia, current_states, setpoints)


# Single-instance convenience wrapper, matching the PyTorch module's signature
# and output shapes: thrust (1,1), torque (3,1), Rd (3,3), desW (3,1).
def lee_controller_single(current_state, setpoint, kp, kv, kw, kr, m, inertia):
    cs = jnp.asarray(current_state, jnp.float32).reshape(13, 1)
    sp = jnp.asarray(setpoint, jnp.float32).reshape(13, 1)
    thrust, torque, rd, desw = lee_controller_pallas(cs, sp, kp, kv, kw, kr, m, inertia)
    return thrust.reshape(1, 1), torque.reshape(3, 1), rd.reshape(3, 3), desw.reshape(3, 1)


# --------------------------------------------------------------------------
# Pure-JAX single-instance reference (mirrors the PyTorch forward, float32)
# --------------------------------------------------------------------------
def lee_controller_ref(cs, sp, kp, kv, kw, kr, m, I):
    f32 = jnp.float32
    cs = cs.astype(f32)
    sp = sp.astype(f32)
    I = I.astype(f32)
    qw, qx, qy, qz = cs[6], cs[7], cs[8], cs[9]
    R = jnp.array(
        [[1 - 2 * (qy * qy + qz * qz), 2 * (qx * qy - qz * qw), 2 * (qx * qz + qy * qw)],
         [2 * (qx * qy + qz * qw), 1 - 2 * (qx * qx + qz * qz), 2 * (qy * qz - qx * qw)],
         [2 * (qx * qz - qy * qw), 2 * (qy * qz + qx * qw), 1 - 2 * (qx * qx + qy * qy)]], f32)
    currPos, currVel, currW = cs[0:3], cs[3:6], cs[10:13]
    desPos, desVel, desAcc, desJerk, yaw = sp[0:3], sp[3:6], sp[6:9], sp[9:12], sp[12]
    ep, ev = currPos - desPos, currVel - desVel
    refAcc = desAcc + jnp.array([0.0, 0.0, _GRAV], f32)
    FdI = refAcc - kp * ep - kv * ev
    thrust = m * jnp.dot(FdI, R[:, 2])
    normFd = jnp.linalg.norm(FdI)
    zdes = jnp.where(normFd > 0, FdI / jnp.where(normFd > 0, normFd, 1.0),
                     jnp.array([0.0, 0.0, 1.0], f32))
    xcdes = jnp.array([jnp.cos(yaw), jnp.sin(yaw), 0.0], f32)
    zxc = jnp.cross(zdes, xcdes)
    normZX = jnp.linalg.norm(zxc)
    ydes = jnp.where(normZX > 0, zxc / jnp.where(normZX > 0, normZX, 1.0),
                     jnp.array([0.0, 1.0, 0.0], f32))
    xdes = jnp.cross(ydes, zdes)
    Rd = jnp.stack([xdes, ydes, zdes], axis=1)
    M = Rd.T @ R - R.T @ Rd
    er = 0.25 * jnp.array([M[2, 1] - M[1, 2], M[0, 2] - M[2, 0], M[1, 0] - M[0, 1]], f32)
    tz = thrust == 0
    zj = jnp.dot(zdes, desJerk)
    hw = jnp.where(tz, jnp.zeros(3, f32),
                   (m / jnp.where(tz, 1.0, thrust)) * (desJerk - zj * zdes))
    desW = jnp.array([-jnp.dot(hw, ydes), jnp.dot(hw, xdes), 0.0], f32)
    ew = currW - R.T @ (Rd @ desW)
    torque = (-kr * er - kw * ew + jnp.cross(currW, I @ currW)
              - I @ jnp.cross(currW, R.T @ (Rd @ desW)))
    return thrust.reshape(1, 1), torque.reshape(3, 1), Rd, desW.reshape(3, 1)


# --------------------------------------------------------------------------
if __name__ == "__main__":
    B = 8                                    # small demo batch of controller instances
    key = jax.random.PRNGKey(0)
    kcs, ksp, kq = jax.random.split(key, 3)

    # (13, B) current states with unit quaternions in rows 6:10
    cs = jax.random.normal(kcs, (13, B), jnp.float32) * 0.3
    quat = jax.random.normal(kq, (4, B), jnp.float32)
    quat = quat / jnp.linalg.norm(quat, axis=0, keepdims=True)
    cs = cs.at[6:10, :].set(quat)
    # (13, B) setpoints
    sp = jax.random.normal(ksp, (13, B), jnp.float32) * 0.3

    # controller / UAV parameters (__init__ defaults: gains = 1.0)
    kp, kv, kw_, kr = 1.0, 1.0, 1.0, 1.0
    m = 1.5
    inertia = jnp.diag(jnp.array([0.02, 0.022, 0.035], jnp.float32))

    thrust, torque, rd, desw = lee_controller_pallas(cs, sp, kp, kv, kw_, kr, m, inertia)
    jax.block_until_ready((thrust, torque, rd, desw))

    thrust_np, torque_np, rd_np, desw_np = map(np.asarray, (thrust, torque, rd, desw))
    for b in range(B):
        t_ref, tau_ref, Rd_ref, w_ref = lee_controller_ref(
            cs[:, b], sp[:, b], kp, kv, kw_, kr, m, inertia)
        np.testing.assert_allclose(thrust_np[0, b], np.asarray(t_ref)[0, 0], rtol=2e-3, atol=2e-3)
        np.testing.assert_allclose(torque_np[:, b], np.asarray(tau_ref)[:, 0], rtol=2e-3, atol=2e-3)
        np.testing.assert_allclose(rd_np[:, b].reshape(3, 3), np.asarray(Rd_ref), rtol=2e-3, atol=2e-3)
        np.testing.assert_allclose(desw_np[:, b], np.asarray(w_ref)[:, 0], rtol=2e-3, atol=2e-3)

    # single-instance path (module-faithful output shapes)
    t1, tau1, Rd1, w1 = lee_controller_single(cs[:, 0], sp[:, 0], kp, kv, kw_, kr, m, inertia)
    jax.block_until_ready((t1, tau1, Rd1, w1))
    t_ref, tau_ref, Rd_ref, w_ref = lee_controller_ref(cs[:, 0], sp[:, 0], kp, kv, kw_, kr, m, inertia)
    np.testing.assert_allclose(np.asarray(t1), np.asarray(t_ref), rtol=2e-3, atol=2e-3)
    np.testing.assert_allclose(np.asarray(tau1), np.asarray(tau_ref), rtol=2e-3, atol=2e-3)
    np.testing.assert_allclose(np.asarray(Rd1), np.asarray(Rd_ref), rtol=2e-3, atol=2e-3)
    np.testing.assert_allclose(np.asarray(w1), np.asarray(w_ref), rtol=2e-3, atol=2e-3)

    print("KERNEL_OK")
</pallas_src>

<mosaic_0001>
module attributes {stable_mosaic.version = 11 : i64} {
  func.func @_controller_kernel(%arg0: i32, %arg1: memref<5xf32, #tpu.memory_space<smem>>, %arg2: memref<3x3xf32, #tpu.memory_space<smem>>, %arg3: memref<13x8xf32, #tpu.memory_space<vmem>>, %arg4: memref<13x8xf32, #tpu.memory_space<vmem>>, %arg5: memref<1x8xf32, #tpu.memory_space<vmem>>, %arg6: memref<3x8xf32, #tpu.memory_space<vmem>>, %arg7: memref<9x8xf32, #tpu.memory_space<vmem>>, %arg8: memref<3x8xf32, #tpu.memory_space<vmem>>) attributes {dimension_semantics = [#tpu.dimension_semantics<parallel>], iteration_bounds = array<i64: 1>, scalar_prefetch = 0 : i64, scratch_operands = 0 : i64, tpu.core_type = #tpu.core_type<tc>, window_params = [{transform_indices = @transform_0, window_bounds = array<i64: 5>}, {transform_indices = @transform_1, window_bounds = array<i64: 3, 3>}, {transform_indices = @transform_2, window_bounds = array<i64: 13, 8>}, {transform_indices = @transform_3, window_bounds = array<i64: 13, 8>}, {transform_indices = @transform_4, window_bounds = array<i64: 1, 8>}, {transform_indices = @transform_5, window_bounds = array<i64: 3, 8>}, {transform_indices = @transform_6, window_bounds = array<i64: 9, 8>}, {transform_indices = @transform_7, window_bounds = array<i64: 3, 8>}]} {
    %c0 = arith.constant 0 : index
    %c0_0 = arith.constant 0 : index
    %0 = vector.load %arg3[%c0, %c0_0] : memref<13x8xf32, #tpu.memory_space<vmem>>, vector<13x8xf32>
    %c0_1 = arith.constant 0 : index
    %c0_2 = arith.constant 0 : index
    %1 = vector.load %arg4[%c0_1, %c0_2] : memref<13x8xf32, #tpu.memory_space<vmem>>, vector<13x8xf32>
    %2 = vector.extract_strided_slice %0 {offsets = [0, 0], sizes = [1, 8], strides = [1, 1]} : vector<13x8xf32> to vector<1x8xf32>
    %3 = vector.extract_strided_slice %0 {offsets = [1, 0], sizes = [1, 8], strides = [1, 1]} : vector<13x8xf32> to vector<1x8xf32>
    %4 = vector.extract_strided_slice %0 {offsets = [2, 0], sizes = [1, 8], strides = [1, 1]} : vector<13x8xf32> to vector<1x8xf32>
    %5 = vector.extract_strided_slice %0 {offsets = [3, 0], sizes = [1, 8], strides = [1, 1]} : vector<13x8xf32> to vector<1x8xf32>
    %6 = vector.extract_strided_slice %0 {offsets = [4, 0], sizes = [1, 8], strides = [1, 1]} : vector<13x8xf32> to vector<1x8xf32>
    %7 = vector.extract_strided_slice %0 {offsets = [5, 0], sizes = [1, 8], strides = [1, 1]} : vector<13x8xf32> to vector<1x8xf32>
    %8 = vector.extract_strided_slice %0 {offsets = [6, 0], sizes = [1, 8], strides = [1, 1]} : vector<13x8xf32> to vector<1x8xf32>
    %9 = vector.extract_strided_slice %0 {offsets = [7, 0], sizes = [1, 8], strides = [1, 1]} : vector<13x8xf32> to vector<1x8xf32>
    %10 = vector.extract_strided_slice %0 {offsets = [8, 0], sizes = [1, 8], strides = [1, 1]} : vector<13x8xf32> to vector<1x8xf32>
    %11 = vector.extract_strided_slice %0 {offsets = [9, 0], sizes = [1, 8], strides = [1, 1]} : vector<13x8xf32> to vector<1x8xf32>
    %12 = vector.extract_strided_slice %0 {offsets = [10, 0], sizes = [1, 8], strides = [1, 1]} : vector<13x8xf32> to vector<1x8xf32>
    %13 = vector.extract_strided_slice %0 {offsets = [11, 0], sizes = [1, 8], strides = [1, 1]} : vector<13x8xf32> to vector<1x8xf32>
    %14 = vector.extract_strided_slice %0 {offsets = [12, 0], sizes = [1, 8], strides = [1, 1]} : vector<13x8xf32> to vector<1x8xf32>
    %15 = vector.extract_strided_slice %1 {offsets = [0, 0], sizes = [1, 8], strides = [1, 1]} : vector<13x8xf32> to vector<1x8xf32>
    %16 = vector.extract_strided_slice %1 {offsets = [1, 0], sizes = [1, 8], strides = [1, 1]} : vector<13x8xf32> to vector<1x8xf32>
    %17 = vector.extract_strided_slice %1 {offsets = [2, 0], sizes = [1, 8], strides = [1, 1]} : vector<13x8xf32> to vector<1x8xf32>
    %18 = vector.extract_strided_slice %1 {offsets = [3, 0], sizes = [1, 8], strides = [1, 1]} : vector<13x8xf32> to vector<1x8xf32>
    %19 = vector.extract_strided_slice %1 {offsets = [4, 0], sizes = [1, 8], strides = [1, 1]} : vector<13x8xf32> to vector<1x8xf32>
    %20 = vector.extract_strided_slice %1 {offsets = [5, 0], sizes = [1, 8], strides = [1, 1]} : vector<13x8xf32> to vector<1x8xf32>
    %21 = vector.extract_strided_slice %1 {offsets = [6, 0], sizes = [1, 8], strides = [1, 1]} : vector<13x8xf32> to vector<1x8xf32>
    %22 = vector.extract_strided_slice %1 {offsets = [7, 0], sizes = [1, 8], strides = [1, 1]} : vector<13x8xf32> to vector<1x8xf32>
    %23 = vector.extract_strided_slice %1 {offsets = [8, 0], sizes = [1, 8], strides = [1, 1]} : vector<13x8xf32> to vector<1x8xf32>
    %24 = vector.extract_strided_slice %1 {offsets = [9, 0], sizes = [1, 8], strides = [1, 1]} : vector<13x8xf32> to vector<1x8xf32>
    %25 = vector.extract_strided_slice %1 {offsets = [10, 0], sizes = [1, 8], strides = [1, 1]} : vector<13x8xf32> to vector<1x8xf32>
    %26 = vector.extract_strided_slice %1 {offsets = [11, 0], sizes = [1, 8], strides = [1, 1]} : vector<13x8xf32> to vector<1x8xf32>
    %27 = vector.extract_strided_slice %1 {offsets = [12, 0], sizes = [1, 8], strides = [1, 1]} : vector<13x8xf32> to vector<1x8xf32>
    %28 = arith.mulf %10, %10 : vector<1x8xf32>
    %29 = arith.mulf %11, %11 : vector<1x8xf32>
    %30 = arith.addf %28, %29 : vector<1x8xf32>
    %cst = arith.constant 2.000000e+00 : f32
    %31 = vector.broadcast %cst : f32 to vector<1x8xf32>
    %32 = arith.mulf %31, %30 : vector<1x8xf32>
    %cst_3 = arith.constant 1.000000e+00 : f32
    %33 = vector.broadcast %cst_3 : f32 to vector<1x8xf32>
    %34 = arith.subf %33, %32 : vector<1x8xf32>
    %35 = arith.mulf %9, %10 : vector<1x8xf32>
    %36 = arith.mulf %11, %8 : vector<1x8xf32>
    %37 = arith.subf %35, %36 : vector<1x8xf32>
    %cst_4 = arith.constant 2.000000e+00 : f32
    %38 = vector.broadcast %cst_4 : f32 to vector<1x8xf32>
    %39 = arith.mulf %38, %37 : vector<1x8xf32>
    %40 = arith.mulf %9, %11 : vector<1x8xf32>
    %41 = arith.mulf %10, %8 : vector<1x8xf32>
    %42 = arith.addf %40, %41 : vector<1x8xf32>
    %cst_5 = arith.constant 2.000000e+00 : f32
    %43 = vector.broadcast %cst_5 : f32 to vector<1x8xf32>
    %44 = arith.mulf %43, %42 : vector<1x8xf32>
    %45 = arith.mulf %9, %10 : vector<1x8xf32>
    %46 = arith.mulf %11, %8 : vector<1x8xf32>
    %47 = arith.addf %45, %46 : vector<1x8xf32>
    %cst_6 = arith.constant 2.000000e+00 : f32
    %48 = vector.broadcast %cst_6 : f32 to vector<1x8xf32>
    %49 = arith.mulf %48, %47 : vector<1x8xf32>
    %50 = arith.mulf %9, %9 : vector<1x8xf32>
    %51 = arith.mulf %11, %11 : vector<1x8xf32>
    %52 = arith.addf %50, %51 : vector<1x8xf32>
    %cst_7 = arith.constant 2.000000e+00 : f32
    %53 = vector.broadcast %cst_7 : f32 to vector<1x8xf32>
    %54 = arith.mulf %53, %52 : vector<1x8xf32>
    %cst_8 = arith.constant 1.000000e+00 : f32
    %55 = vector.broadcast %cst_8 : f32 to vector<1x8xf32>
    %56 = arith.subf %55, %54 : vector<1x8xf32>
    %57 = arith.mulf %10, %11 : vector<1x8xf32>
    %58 = arith.mulf %9, %8 : vector<1x8xf32>
    %59 = arith.subf %57, %58 : vector<1x8xf32>
    %cst_9 = arith.constant 2.000000e+00 : f32
    %60 = vector.broadcast %cst_9 : f32 to vector<1x8xf32>
    %61 = arith.mulf %60, %59 : vector<1x8xf32>
    %62 = arith.mulf %9, %11 : vector<1x8xf32>
    %63 = arith.mulf %10, %8 : vector<1x8xf32>
    %64 = arith.subf %62, %63 : vector<1x8xf32>
    %cst_10 = arith.constant 2.000000e+00 : f32
    %65 = vector.broadcast %cst_10 : f32 to vector<1x8xf32>
    %66 = arith.mulf %65, %64 : vector<1x8xf32>
    %67 = arith.mulf %10, %11 : vector<1x8xf32>
    %68 = arith.mulf %9, %8 : vector<1x8xf32>
    %69 = arith.addf %67, %68 : vector<1x8xf32>
    %cst_11 = arith.constant 2.000000e+00 : f32
    %70 = vector.broadcast %cst_11 : f32 to vector<1x8xf32>
    %71 = arith.mulf %70, %69 : vector<1x8xf32>
    %72 = arith.mulf %9, %9 : vector<1x8xf32>
    %73 = arith.mulf %10, %10 : vector<1x8xf32>
    %74 = arith.addf %72, %73 : vector<1x8xf32>
    %cst_12 = arith.constant 2.000000e+00 : f32
    %75 = vector.broadcast %cst_12 : f32 to vector<1x8xf32>
    %76 = arith.mulf %75, %74 : vector<1x8xf32>
    %cst_13 = arith.constant 1.000000e+00 : f32
    %77 = vector.broadcast %cst_13 : f32 to vector<1x8xf32>
    %78 = arith.subf %77, %76 : vector<1x8xf32>
    %c0_14 = arith.constant 0 : index
    %79 = memref.load %arg1[%c0_14] : memref<5xf32, #tpu.memory_space<smem>>
    %c1 = arith.constant 1 : index
    %80 = memref.load %arg1[%c1] : memref<5xf32, #tpu.memory_space<smem>>
    %c4 = arith.constant 4 : index
    %81 = memref.load %arg1[%c4] : memref<5xf32, #tpu.memory_space<smem>>
    %82 = arith.subf %2, %15 : vector<1x8xf32>
    %83 = arith.subf %3, %16 : vector<1x8xf32>
    %84 = arith.subf %4, %17 : vector<1x8xf32>
    %85 = arith.subf %5, %18 : vector<1x8xf32>
    %86 = arith.subf %6, %19 : vector<1x8xf32>
    %87 = arith.subf %7, %20 : vector<1x8xf32>
    %cst_15 = arith.constant 9.810000e+00 : f32
    %88 = vector.broadcast %cst_15 : f32 to vector<1x8xf32>
    %89 = arith.addf %23, %88 : vector<1x8xf32>
    %90 = vector.broadcast %79 : f32 to vector<1x8xf32>
    %91 = arith.mulf %90, %82 : vector<1x8xf32>
    %92 = arith.subf %21, %91 : vector<1x8xf32>
    %93 = vector.broadcast %80 : f32 to vector<1x8xf32>
    %94 = arith.mulf %93, %85 : vector<1x8xf32>
    %95 = arith.subf %92, %94 : vector<1x8xf32>
    %96 = vector.broadcast %79 : f32 to vector<1x8xf32>
    %97 = arith.mulf %96, %83 : vector<1x8xf32>
    %98 = arith.subf %22, %97 : vector<1x8xf32>
    %99 = vector.broadcast %80 : f32 to vector<1x8xf32>
    %100 = arith.mulf %99, %86 : vector<1x8xf32>
    %101 = arith.subf %98, %100 : vector<1x8xf32>
    %102 = vector.broadcast %79 : f32 to vector<1x8xf32>
    %103 = arith.mulf %102, %84 : vector<1x8xf32>
    %104 = arith.subf %89, %103 : vector<1x8xf32>
    %105 = vector.broadcast %80 : f32 to vector<1x8xf32>
    %106 = arith.mulf %105, %87 : vector<1x8xf32>
    %107 = arith.subf %104, %106 : vector<1x8xf32>
    %108 = arith.mulf %95, %44 : vector<1x8xf32>
    %109 = arith.mulf %101, %61 : vector<1x8xf32>
    %110 = arith.addf %108, %109 : vector<1x8xf32>
    %111 = arith.mulf %107, %78 : vector<1x8xf32>
    %112 = arith.addf %110, %111 : vector<1x8xf32>
    %113 = vector.broadcast %81 : f32 to vector<1x8xf32>
    %114 = arith.mulf %113, %112 : vector<1x8xf32>
    %115 = arith.mulf %95, %95 : vector<1x8xf32>
    %116 = arith.mulf %101, %101 : vector<1x8xf32>
    %117 = arith.addf %115, %116 : vector<1x8xf32>
    %118 = arith.mulf %107, %107 : vector<1x8xf32>
    %119 = arith.addf %117, %118 : vector<1x8xf32>
    %cst_16 = arith.constant 0.000000e+00 : f32
    %120 = vector.broadcast %cst_16 : f32 to vector<1x8xf32>
    %121 = arith.cmpf ogt, %119, %120 : vector<1x8xf32>
    %cst_17 = arith.constant 1.000000e+00 : f32
    %122 = vector.broadcast %cst_17 : f32 to vector<1x8xf32>
    %123 = arith.select %121, %119, %122 : vector<1x8xi1>, vector<1x8xf32>
    %124 = math.rsqrt %123 : vector<1x8xf32>
    %125 = arith.mulf %95, %124 : vector<1x8xf32>
    %cst_18 = arith.constant 0.000000e+00 : f32
    %126 = vector.broadcast %cst_18 : f32 to vector<1x8xf32>
    %127 = arith.select %121, %125, %126 : vector<1x8xi1>, vector<1x8xf32>
    %128 = arith.mulf %101, %124 : vector<1x8xf32>
    %cst_19 = arith.constant 0.000000e+00 : f32
    %129 = vector.broadcast %cst_19 : f32 to vector<1x8xf32>
    %130 = arith.select %121, %128, %129 : vector<1x8xi1>, vector<1x8xf32>
    %131 = arith.mulf %107, %124 : vector<1x8xf32>
    %cst_20 = arith.constant 1.000000e+00 : f32
    %132 = vector.broadcast %cst_20 : f32 to vector<1x8xf32>
    %133 = arith.select %121, %131, %132 : vector<1x8xi1>, vector<1x8xf32>
    %134 = math.cos %27 : vector<1x8xf32>
    %135 = math.sin %27 : vector<1x8xf32>
    %cst_21 = arith.constant 0.000000e+00 : f32
    %136 = vector.broadcast %cst_21 : f32 to vector<1x8xf32>
    %137 = arith.mulf %130, %136 : vector<1x8xf32>
    %138 = arith.mulf %133, %135 : vector<1x8xf32>
    %139 = arith.subf %137, %138 : vector<1x8xf32>
    %140 = arith.mulf %133, %134 : vector<1x8xf32>
    %141 = arith.mulf %127, %136 : vector<1x8xf32>
    %142 = arith.subf %140, %141 : vector<1x8xf32>
    %143 = arith.mulf %127, %135 : vector<1x8xf32>
    %144 = arith.mulf %130, %134 : vector<1x8xf32>
    %145 = arith.subf %143, %144 : vector<1x8xf32>
    %146 = arith.mulf %139, %139 : vector<1x8xf32>
    %147 = arith.mulf %142, %142 : vector<1x8xf32>
    %148 = arith.addf %146, %147 : vector<1x8xf32>
    %149 = arith.mulf %145, %145 : vector<1x8xf32>
    %150 = arith.addf %148, %149 : vector<1x8xf32>
    %cst_22 = arith.constant 0.000000e+00 : f32
    %151 = vector.broadcast %cst_22 : f32 to vector<1x8xf32>
    %152 = arith.cmpf ogt, %150, %151 : vector<1x8xf32>
    %cst_23 = arith.constant 1.000000e+00 : f32
    %153 = vector.broadcast %cst_23 : f32 to vector<1x8xf32>
    %154 = arith.select %152, %150, %153 : vector<1x8xi1>, vector<1x8xf32>
    %155 = math.rsqrt %154 : vector<1x8xf32>
    %156 = arith.mulf %139, %155 : vector<1x8xf32>
    %cst_24 = arith.constant 0.000000e+00 : f32
    %157 = vector.broadcast %cst_24 : f32 to vector<1x8xf32>
    %158 = arith.select %152, %156, %157 : vector<1x8xi1>, vector<1x8xf32>
    %159 = arith.mulf %142, %155 : vector<1x8xf32>
    %cst_25 = arith.constant 1.000000e+00 : f32
    %160 = vector.broadcast %cst_25 : f32 to vector<1x8xf32>
    %161 = arith.select %152, %159, %160 : vector<1x8xi1>, vector<1x8xf32>
    %162 = arith.mulf %145, %155 : vector<1x8xf32>
    %cst_26 = arith.constant 0.000000e+00 : f32
    %163 = vector.broadcast %cst_26 : f32 to vector<1x8xf32>
    %164 = arith.select %152, %162, %163 : vector<1x8xi1>, vector<1x8xf32>
    %165 = arith.mulf %161, %133 : vector<1x8xf32>
    %166 = arith.mulf %164, %130 : vector<1x8xf32>
    %167 = arith.subf %165, %166 : vector<1x8xf32>
    %168 = arith.mulf %164, %127 : vector<1x8xf32>
    %169 = arith.mulf %158, %133 : vector<1x8xf32>
    %170 = arith.subf %168, %169 : vector<1x8xf32>
    %171 = arith.mulf %158, %130 : vector<1x8xf32>
    %172 = arith.mulf %161, %127 : vector<1x8xf32>
    %173 = arith.subf %171, %172 : vector<1x8xf32>
    %174 = arith.mulf %127, %39 : vector<1x8xf32>
    %175 = arith.mulf %130, %56 : vector<1x8xf32>
    %176 = arith.addf %174, %175 : vector<1x8xf32>
    %177 = arith.mulf %133, %71 : vector<1x8xf32>
    %178 = arith.addf %176, %177 : vector<1x8xf32>
    %179 = arith.mulf %158, %44 : vector<1x8xf32>
    %180 = arith.mulf %161, %61 : vector<1x8xf32>
    %181 = arith.addf %179, %180 : vector<1x8xf32>
    %182 = arith.mulf %164, %78 : vector<1x8xf32>
    %183 = arith.addf %181, %182 : vector<1x8xf32>
    %184 = arith.mulf %167, %44 : vector<1x8xf32>
    %185 = arith.mulf %170, %61 : vector<1x8xf32>
    %186 = arith.addf %184, %185 : vector<1x8xf32>
    %187 = arith.mulf %173, %78 : vector<1x8xf32>
    %188 = arith.addf %186, %187 : vector<1x8xf32>
    %189 = arith.mulf %127, %34 : vector<1x8xf32>
    %190 = arith.mulf %130, %49 : vector<1x8xf32>
    %191 = arith.addf %189, %190 : vector<1x8xf32>
    %192 = arith.mulf %133, %66 : vector<1x8xf32>
    %193 = arith.addf %191, %192 : vector<1x8xf32>
    %194 = arith.mulf %158, %34 : vector<1x8xf32>
    %195 = arith.mulf %161, %49 : vector<1x8xf32>
    %196 = arith.addf %194, %195 : vector<1x8xf32>
    %197 = arith.mulf %164, %66 : vector<1x8xf32>
    %198 = arith.addf %196, %197 : vector<1x8xf32>
    %199 = arith.mulf %167, %39 : vector<1x8xf32>
    %200 = arith.mulf %170, %56 : vector<1x8xf32>
    %201 = arith.addf %199, %200 : vector<1x8xf32>
    %202 = arith.mulf %173, %71 : vector<1x8xf32>
    %203 = arith.addf %201, %202 : vector<1x8xf32>
    %204 = arith.subf %178, %183 : vector<1x8xf32>
    %cst_27 = arith.constant 5.000000e-01 : f32
    %205 = vector.broadcast %cst_27 : f32 to vector<1x8xf32>
    %206 = arith.mulf %205, %204 : vector<1x8xf32>
    %207 = arith.subf %188, %193 : vector<1x8xf32>
    %cst_28 = arith.constant 5.000000e-01 : f32
    %208 = vector.broadcast %cst_28 : f32 to vector<1x8xf32>
    %209 = arith.mulf %208, %207 : vector<1x8xf32>
    %210 = arith.subf %198, %203 : vector<1x8xf32>
    %cst_29 = arith.constant 5.000000e-01 : f32
    %211 = vector.broadcast %cst_29 : f32 to vector<1x8xf32>
    %212 = arith.mulf %211, %210 : vector<1x8xf32>
    %cst_30 = arith.constant 0.000000e+00 : f32
    %213 = vector.broadcast %cst_30 : f32 to vector<1x8xf32>
    %214 = arith.cmpf oeq, %114, %213 : vector<1x8xf32>
    %cst_31 = arith.constant 1.000000e+00 : f32
    %215 = vector.broadcast %cst_31 : f32 to vector<1x8xf32>
    %216 = arith.select %214, %215, %114 : vector<1x8xi1>, vector<1x8xf32>
    %217 = vector.broadcast %81 : f32 to vector<1x8xf32>
    %218 = arith.divf %217, %216 : vector<1x8xf32>
    %cst_32 = arith.constant 0.000000e+00 : f32
    %219 = vector.broadcast %cst_32 : f32 to vector<1x8xf32>
    %220 = arith.select %214, %219, %218 : vector<1x8xi1>, vector<1x8xf32>
    %221 = arith.mulf %127, %24 : vector<1x8xf32>
    %222 = arith.mulf %130, %25 : vector<1x8xf32>
    %223 = arith.addf %221, %222 : vector<1x8xf32>
    %224 = arith.mulf %133, %26 : vector<1x8xf32>
    %225 = arith.addf %223, %224 : vector<1x8xf32>
    %226 = arith.mulf %225, %127 : vector<1x8xf32>
    %227 = arith.subf %24, %226 : vector<1x8xf32>
    %228 = arith.mulf %220, %227 : vector<1x8xf32>
    %229 = arith.mulf %225, %130 : vector<1x8xf32>
    %230 = arith.subf %25, %229 : vector<1x8xf32>
    %231 = arith.mulf %220, %230 : vector<1x8xf32>
    %232 = arith.mulf %225, %133 : vector<1x8xf32>
    %233 = arith.subf %26, %232 : vector<1x8xf32>
    %234 = arith.mulf %220, %233 : vector<1x8xf32>
    %235 = arith.mulf %228, %158 : vector<1x8xf32>
    %236 = arith.mulf %231, %161 : vector<1x8xf32>
    %237 = arith.addf %235, %236 : vector<1x8xf32>
    %238 = arith.mulf %234, %164 : vector<1x8xf32>
    %239 = arith.addf %237, %238 : vector<1x8xf32>
    %cst_33 = arith.constant 0.000000e+00 : f32
    %240 = vector.broadcast %cst_33 : f32 to vector<1x8xf32>
    %241 = arith.subf %240, %239 : vector<1x8xf32>
    %242 = arith.mulf %228, %167 : vector<1x8xf32>
    %243 = arith.mulf %231, %170 : vector<1x8xf32>
    %244 = arith.addf %242, %243 : vector<1x8xf32>
    %245 = arith.mulf %234, %173 : vector<1x8xf32>
    %246 = arith.addf %244, %245 : vector<1x8xf32>
    %cst_34 = arith.constant 0.000000e+00 : f32
    %247 = vector.broadcast %cst_34 : f32 to vector<1x8xf32>
    %248 = arith.mulf %241, %167 : vector<1x8xf32>
    %249 = arith.mulf %246, %158 : vector<1x8xf32>
    %250 = arith.addf %248, %249 : vector<1x8xf32>
    %251 = arith.mulf %241, %170 : vector<1x8xf32>
    %252 = arith.mulf %246, %161 : vector<1x8xf32>
    %253 = arith.addf %251, %252 : vector<1x8xf32>
    %254 = arith.mulf %241, %173 : vector<1x8xf32>
    %255 = arith.mulf %246, %164 : vector<1x8xf32>
    %256 = arith.addf %254, %255 : vector<1x8xf32>
    %257 = arith.mulf %34, %250 : vector<1x8xf32>
    %258 = arith.mulf %49, %253 : vector<1x8xf32>
    %259 = arith.addf %257, %258 : vector<1x8xf32>
    %260 = arith.mulf %66, %256 : vector<1x8xf32>
    %261 = arith.addf %259, %260 : vector<1x8xf32>
    %262 = arith.mulf %39, %250 : vector<1x8xf32>
    %263 = arith.mulf %56, %253 : vector<1x8xf32>
    %264 = arith.addf %262, %263 : vector<1x8xf32>
    %265 = arith.mulf %71, %256 : vector<1x8xf32>
    %266 = arith.addf %264, %265 : vector<1x8xf32>
    %267 = arith.mulf %44, %250 : vector<1x8xf32>
    %268 = arith.mulf %61, %253 : vector<1x8xf32>
    %269 = arith.addf %267, %268 : vector<1x8xf32>
    %270 = arith.mulf %78, %256 : vector<1x8xf32>
    %271 = arith.addf %269, %270 : vector<1x8xf32>
    %272 = arith.subf %12, %261 : vector<1x8xf32>
    %273 = arith.subf %13, %266 : vector<1x8xf32>
    %274 = arith.subf %14, %271 : vector<1x8xf32>
    %c2 = arith.constant 2 : index
    %275 = memref.load %arg1[%c2] : memref<5xf32, #tpu.memory_space<smem>>
    %c3 = arith.constant 3 : index
    %276 = memref.load %arg1[%c3] : memref<5xf32, #tpu.memory_space<smem>>
    %c0_35 = arith.constant 0 : index
    %c0_36 = arith.constant 0 : index
    %277 = memref.load %arg2[%c0_35, %c0_36] : memref<3x3xf32, #tpu.memory_space<smem>>
    %c0_37 = arith.constant 0 : index
    %c1_38 = arith.constant 1 : index
    %278 = memref.load %arg2[%c0_37, %c1_38] : memref<3x3xf32, #tpu.memory_space<smem>>
    %c0_39 = arith.constant 0 : index
    %c2_40 = arith.constant 2 : index
    %279 = memref.load %arg2[%c0_39, %c2_40] : memref<3x3xf32, #tpu.memory_space<smem>>
    %c1_41 = arith.constant 1 : index
    %c0_42 = arith.constant 0 : index
    %280 = memref.load %arg2[%c1_41, %c0_42] : memref<3x3xf32, #tpu.memory_space<smem>>
    %c1_43 = arith.constant 1 : index
    %c1_44 = arith.constant 1 : index
    %281 = memref.load %arg2[%c1_43, %c1_44] : memref<3x3xf32, #tpu.memory_space<smem>>
    %c1_45 = arith.constant 1 : index
    %c2_46 = arith.constant 2 : index
    %282 = memref.load %arg2[%c1_45, %c2_46] : memref<3x3xf32, #tpu.memory_space<smem>>
    %c2_47 = arith.constant 2 : index
    %c0_48 = arith.constant 0 : index
    %283 = memref.load %arg2[%c2_47, %c0_48] : memref<3x3xf32, #tpu.memory_space<smem>>
    %c2_49 = arith.constant 2 : index
    %c1_50 = arith.constant 1 : index
    %284 = memref.load %arg2[%c2_49, %c1_50] : memref<3x3xf32, #tpu.memory_space<smem>>
    %c2_51 = arith.constant 2 : index
    %c2_52 = arith.constant 2 : index
    %285 = memref.load %arg2[%c2_51, %c2_52] : memref<3x3xf32, #tpu.memory_space<smem>>
    %286 = vector.broadcast %277 : f32 to vector<1x8xf32>
    %287 = arith.mulf %286, %12 : vector<1x8xf32>
    %288 = vector.broadcast %278 : f32 to vector<1x8xf32>
    %289 = arith.mulf %288, %13 : vector<1x8xf32>
    %290 = arith.addf %287, %289 : vector<1x8xf32>
    %291 = vector.broadcast %279 : f32 to vector<1x8xf32>
    %292 = arith.mulf %291, %14 : vector<1x8xf32>
    %293 = arith.addf %290, %292 : vector<1x8xf32>
    %294 = vector.broadcast %280 : f32 to vector<1x8xf32>
    %295 = arith.mulf %294, %12 : vector<1x8xf32>
    %296 = vector.broadcast %281 : f32 to vector<1x8xf32>
    %297 = arith.mulf %296, %13 : vector<1x8xf32>
    %298 = arith.addf %295, %297 : vector<1x8xf32>
    %299 = vector.broadcast %282 : f32 to vector<1x8xf32>
    %300 = arith.mulf %299, %14 : vector<1x8xf32>
    %301 = arith.addf %298, %300 : vector<1x8xf32>
    %302 = vector.broadcast %283 : f32 to vector<1x8xf32>
    %303 = arith.mulf %302, %12 : vector<1x8xf32>
    %304 = vector.broadcast %284 : f32 to vector<1x8xf32>
    %305 = arith.mulf %304, %13 : vector<1x8xf32>
    %306 = arith.addf %303, %305 : vector<1x8xf32>
    %307 = vector.broadcast %285 : f32 to vector<1x8xf32>
    %308 = arith.mulf %307, %14 : vector<1x8xf32>
    %309 = arith.addf %306, %308 : vector<1x8xf32>
    %310 = arith.mulf %13, %309 : vector<1x8xf32>
    %311 = arith.mulf %14, %301 : vector<1x8xf32>
    %312 = arith.subf %310, %311 : vector<1x8xf32>
    %313 = arith.mulf %14, %293 : vector<1x8xf32>
    %314 = arith.mulf %12, %309 : vector<1x8xf32>
    %315 = arith.subf %313, %314 : vector<1x8xf32>
    %316 = arith.mulf %12, %301 : vector<1x8xf32>
    %317 = arith.mulf %13, %293 : vector<1x8xf32>
    %318 = arith.subf %316, %317 : vector<1x8xf32>
    %319 = arith.mulf %13, %271 : vector<1x8xf32>
    %320 = arith.mulf %14, %266 : vector<1x8xf32>
    %321 = arith.subf %319, %320 : vector<1x8xf32>
    %322 = arith.mulf %14, %261 : vector<1x8xf32>
    %323 = arith.mulf %12, %271 : vector<1x8xf32>
    %324 = arith.subf %322, %323 : vector<1x8xf32>
    %325 = arith.mulf %12, %266 : vector<1x8xf32>
    %326 = arith.mulf %13, %261 : vector<1x8xf32>
    %327 = arith.subf %325, %326 : vector<1x8xf32>
    %328 = vector.broadcast %277 : f32 to vector<1x8xf32>
    %329 = arith.mulf %328, %321 : vector<1x8xf32>
    %330 = vector.broadcast %278 : f32 to vector<1x8xf32>
    %331 = arith.mulf %330, %324 : vector<1x8xf32>
    %332 = arith.addf %329, %331 : vector<1x8xf32>
    %333 = vector.broadcast %279 : f32 to vector<1x8xf32>
    %334 = arith.mulf %333, %327 : vector<1x8xf32>
    %335 = arith.addf %332, %334 : vector<1x8xf32>
    %336 = vector.broadcast %280 : f32 to vector<1x8xf32>
    %337 = arith.mulf %336, %321 : vector<1x8xf32>
    %338 = vector.broadcast %281 : f32 to vector<1x8xf32>
    %339 = arith.mulf %338, %324 : vector<1x8xf32>
    %340 = arith.addf %337, %339 : vector<1x8xf32>
    %341 = vector.broadcast %282 : f32 to vector<1x8xf32>
    %342 = arith.mulf %341, %327 : vector<1x8xf32>
    %343 = arith.addf %340, %342 : vector<1x8xf32>
    %344 = vector.broadcast %283 : f32 to vector<1x8xf32>
    %345 = arith.mulf %344, %321 : vector<1x8xf32>
    %346 = vector.broadcast %284 : f32 to vector<1x8xf32>
    %347 = arith.mulf %346, %324 : vector<1x8xf32>
    %348 = arith.addf %345, %347 : vector<1x8xf32>
    %349 = vector.broadcast %285 : f32 to vector<1x8xf32>
    %350 = arith.mulf %349, %327 : vector<1x8xf32>
    %351 = arith.addf %348, %350 : vector<1x8xf32>
    %cst_53 = arith.constant 0.000000e+00 : f32
    %352 = arith.subf %cst_53, %276 : f32
    %353 = vector.broadcast %352 : f32 to vector<1x8xf32>
    %354 = arith.mulf %353, %206 : vector<1x8xf32>
    %355 = vector.broadcast %275 : f32 to vector<1x8xf32>
    %356 = arith.mulf %355, %272 : vector<1x8xf32>
    %357 = arith.subf %354, %356 : vector<1x8xf32>
    %358 = arith.addf %357, %312 : vector<1x8xf32>
    %359 = arith.subf %358, %335 : vector<1x8xf32>
    %cst_54 = arith.constant 0.000000e+00 : f32
    %360 = arith.subf %cst_54, %276 : f32
    %361 = vector.broadcast %360 : f32 to vector<1x8xf32>
    %362 = arith.mulf %361, %209 : vector<1x8xf32>
    %363 = vector.broadcast %275 : f32 to vector<1x8xf32>
    %364 = arith.mulf %363, %273 : vector<1x8xf32>
    %365 = arith.subf %362, %364 : vector<1x8xf32>
    %366 = arith.addf %365, %315 : vector<1x8xf32>
    %367 = arith.subf %366, %343 : vector<1x8xf32>
    %cst_55 = arith.constant 0.000000e+00 : f32
    %368 = arith.subf %cst_55, %276 : f32
    %369 = vector.broadcast %368 : f32 to vector<1x8xf32>
    %370 = arith.mulf %369, %212 : vector<1x8xf32>
    %371 = vector.broadcast %275 : f32 to vector<1x8xf32>
    %372 = arith.mulf %371, %274 : vector<1x8xf32>
    %373 = arith.subf %370, %372 : vector<1x8xf32>
    %374 = arith.addf %373, %318 : vector<1x8xf32>
    %375 = arith.subf %374, %351 : vector<1x8xf32>
    %c0_56 = arith.constant 0 : index
    %c0_57 = arith.constant 0 : index
    %376 = vector.load %arg5[%c0_56, %c0_57] : memref<1x8xf32, #tpu.memory_space<vmem>>, vector<1x8xf32>
    tpu.vector_store %arg5[%c0_56, %c0_57], %114 {strides = array<i32>} : memref<1x8xf32, #tpu.memory_space<vmem>>, vector<1x8xf32>,
    %c0_58 = arith.constant 0 : index
    %c0_59 = arith.constant 0 : index
    %377 = vector.load %arg6[%c0_58, %c0_59] : memref<3x8xf32, #tpu.memory_space<vmem>>, vector<1x8xf32>
    tpu.vector_store %arg6[%c0_58, %c0_59], %359 {strides = array<i32>} : memref<3x8xf32, #tpu.memory_space<vmem>>, vector<1x8xf32>,
    %c0_60 = arith.constant 0 : index
    %c0_61 = arith.constant 0 : index
    %378 = vector.load %arg8[%c0_60, %c0_61] : memref<3x8xf32, #tpu.memory_space<vmem>>, vector<1x8xf32>
    tpu.vector_store %arg8[%c0_60, %c0_61], %241 {strides = array<i32>} : memref<3x8xf32, #tpu.memory_space<vmem>>, vector<1x8xf32>,
    %c1_62 = arith.constant 1 : index
    %c0_63 = arith.constant 0 : index
    %379 = vector.load %arg6[%c1_62, %c0_63] : memref<3x8xf32, #tpu.memory_space<vmem>>, vector<1x8xf32>
    tpu.vector_store %arg6[%c1_62, %c0_63], %367 {strides = array<i32>} : memref<3x8xf32, #tpu.memory_space<vmem>>, vector<1x8xf32>,
    %c1_64 = arith.constant 1 : index
    %c0_65 = arith.constant 0 : index
    %380 = vector.load %arg8[%c1_64, %c0_65] : memref<3x8xf32, #tpu.memory_space<vmem>>, vector<1x8xf32>
    tpu.vector_store %arg8[%c1_64, %c0_65], %246 {strides = array<i32>} : memref<3x8xf32, #tpu.memory_space<vmem>>, vector<1x8xf32>,
    %c2_66 = arith.constant 2 : index
    %c0_67 = arith.constant 0 : index
    %381 = vector.load %arg6[%c2_66, %c0_67] : memref<3x8xf32, #tpu.memory_space<vmem>>, vector<1x8xf32>
    tpu.vector_store %arg6[%c2_66, %c0_67], %375 {strides = array<i32>} : memref<3x8xf32, #tpu.memory_space<vmem>>, vector<1x8xf32>,
    %c2_68 = arith.constant 2 : index
    %c0_69 = arith.constant 0 : index
    %382 = vector.load %arg8[%c2_68, %c0_69] : memref<3x8xf32, #tpu.memory_space<vmem>>, vector<1x8xf32>
    tpu.vector_store %arg8[%c2_68, %c0_69], %247 {strides = array<i32>} : memref<3x8xf32, #tpu.memory_space<vmem>>, vector<1x8xf32>,
    %c0_70 = arith.constant 0 : index
    %c0_71 = arith.constant 0 : index
    %383 = vector.load %arg7[%c0_70, %c0_71] : memref<9x8xf32, #tpu.memory_space<vmem>>, vector<1x8xf32>
    tpu.vector_store %arg7[%c0_70, %c0_71], %167 {strides = array<i32>} : memref<9x8xf32, #tpu.memory_space<vmem>>, vector<1x8xf32>,
    %c1_72 = arith.constant 1 : index
    %c0_73 = arith.constant 0 : index
    %384 = vector.load %arg7[%c1_72, %c0_73] : memref<9x8xf32, #tpu.memory_space<vmem>>, vector<1x8xf32>
    tpu.vector_store %arg7[%c1_72, %c0_73], %158 {strides = array<i32>} : memref<9x8xf32, #tpu.memory_space<vmem>>, vector<1x8xf32>,
    %c2_74 = arith.constant 2 : index
    %c0_75 = arith.constant 0 : index
    %385 = vector.load %arg7[%c2_74, %c0_75] : memref<9x8xf32, #tpu.memory_space<vmem>>, vector<1x8xf32>
    tpu.vector_store %arg7[%c2_74, %c0_75], %127 {strides = array<i32>} : memref<9x8xf32, #tpu.memory_space<vmem>>, vector<1x8xf32>,
    %c3_76 = arith.constant 3 : index
    %c0_77 = arith.constant 0 : index
    %386 = vector.load %arg7[%c3_76, %c0_77] : memref<9x8xf32, #tpu.memory_space<vmem>>, vector<1x8xf32>
    tpu.vector_store %arg7[%c3_76, %c0_77], %170 {strides = array<i32>} : memref<9x8xf32, #tpu.memory_space<vmem>>, vector<1x8xf32>,
    %c4_78 = arith.constant 4 : index
    %c0_79 = arith.constant 0 : index
    %387 = vector.load %arg7[%c4_78, %c0_79] : memref<9x8xf32, #tpu.memory_space<vmem>>, vector<1x8xf32>
    tpu.vector_store %arg7[%c4_78, %c0_79], %161 {strides = array<i32>} : memref<9x8xf32, #tpu.memory_space<vmem>>, vector<1x8xf32>,
    %c5 = arith.constant 5 : index
    %c0_80 = arith.constant 0 : index
    %388 = vector.load %arg7[%c5, %c0_80] : memref<9x8xf32, #tpu.memory_space<vmem>>, vector<1x8xf32>
    tpu.vector_store %arg7[%c5, %c0_80], %130 {strides = array<i32>} : memref<9x8xf32, #tpu.memory_space<vmem>>, vector<1x8xf32>,
    %c6 = arith.constant 6 : index
    %c0_81 = arith.constant 0 : index
    %389 = vector.load %arg7[%c6, %c0_81] : memref<9x8xf32, #tpu.memory_space<vmem>>, vector<1x8xf32>
    tpu.vector_store %arg7[%c6, %c0_81], %173 {strides = array<i32>} : memref<9x8xf32, #tpu.memory_space<vmem>>, vector<1x8xf32>,
    %c7 = arith.constant 7 : index
    %c0_82 = arith.constant 0 : index
    %390 = vector.load %arg7[%c7, %c0_82] : memref<9x8xf32, #tpu.memory_space<vmem>>, vector<1x8xf32>
    tpu.vector_store %arg7[%c7, %c0_82], %164 {strides = array<i32>} : memref<9x8xf32, #tpu.memory_space<vmem>>, vector<1x8xf32>,
    %c8 = arith.constant 8 : index
    %c0_83 = arith.constant 0 : index
    %391 = vector.load %arg7[%c8, %c0_83] : memref<9x8xf32, #tpu.memory_space<vmem>>, vector<1x8xf32>
    tpu.vector_store %arg7[%c8, %c0_83], %133 {strides = array<i32>} : memref<9x8xf32, #tpu.memory_space<vmem>>, vector<1x8xf32>,
    return
  }
  func.func @transform_0(%arg0: i32) -> i32 {
    %c0_i32 = arith.constant 0 : i32
    %c0_i32_0 = arith.constant 0 : i32
    return %c0_i32 : i32
  }
  func.func @transform_1(%arg0: i32) -> (i32, i32) {
    %c0_i32 = arith.constant 0 : i32
    %c0_i32_0 = arith.constant 0 : i32
    %c0_i32_1 = arith.constant 0 : i32
    return %c0_i32, %c0_i32_0 : i32, i32
  }
  func.func @transform_2(%arg0: i32) -> (i32, i32) {
    %c0_i32 = arith.constant 0 : i32
    %c0_i32_0 = arith.constant 0 : i32
    return %c0_i32, %arg0 : i32, i32
  }
  func.func @transform_3(%arg0: i32) -> (i32, i32) {
    %c0_i32 = arith.constant 0 : i32
    %c0_i32_0 = arith.constant 0 : i32
    return %c0_i32, %arg0 : i32, i32
  }
  func.func @transform_4(%arg0: i32) -> (i32, i32) {
    %c0_i32 = arith.constant 0 : i32
    %c0_i32_0 = arith.constant 0 : i32
    return %c0_i32, %arg0 : i32, i32
  }
  func.func @transform_5(%arg0: i32) -> (i32, i32) {
    %c0_i32 = arith.constant 0 : i32
    %c0_i32_0 = arith.constant 0 : i32
    return %c0_i32, %arg0 : i32, i32
  }
  func.func @transform_6(%arg0: i32) -> (i32, i32) {
    %c0_i32 = arith.constant 0 : i32
    %c0_i32_0 = arith.constant 0 : i32
    return %c0_i32, %arg0 : i32, i32
  }
  func.func @transform_7(%arg0: i32) -> (i32, i32) {
    %c0_i32 = arith.constant 0 : i32
    %c0_i32_0 = arith.constant 0 : i32
    return %c0_i32, %arg0 : i32, i32
  }
}

</mosaic_0001>

<llo_original>
// kernel: tpu_custom_call.1
$region0: #{tpu_custom_call.1}
  #allocation0 [shape = 'u32[]', space=smem, size = 0x4, offset = 0x4, fixed_abs, tag = 'smem constant byte address 0x4 - core index']
  #allocation1 [shape = 'u32[72,128]{1,0:T(1,128)}', space=vmem, size = 0x9000, scoped, tag = 'internal scratch']
  %s0 = inlined_call_operand.vmem [shape: f32[5], index: 0, kind: input, shape index: {}]
  %s1 = inlined_call_operand.vmem [shape: f32[3,3], index: 1, kind: input, shape index: {}]
  %s2 = inlined_call_operand.vmem [shape: f32[13,8], index: 2, kind: input, shape index: {}]
  %s3 = inlined_call_operand.vmem [shape: f32[13,8], index: 3, kind: input, shape index: {}]
  %s4 = inlined_call_operand.hbm [shape: f32[1,8], index: 4, kind: output, shape index: {0}]
  %s5 = inlined_call_operand.hbm [shape: f32[3,8], index: 5, kind: output, shape index: {1}]
  %s6 = inlined_call_operand.vmem [shape: f32[9,8], index: 6, kind: output, shape index: {2}]
  %s7 = inlined_call_operand.hbm [shape: f32[3,8], index: 7, kind: output, shape index: {3}]
  %8 = xla_tuple %s4, %s5, %s6, %s7
  %s9 = sld [smem:[#allocation0]]
  $region58: #{tpu_custom_call.1} parent=0
    _
  %s11 = ssub.s32 1, %s9
  %s12 = scalar_select 0, %s11, %s9
  $region1: #{tpu_custom_call.1} parent=0
    #allocation2 [shape = 'u8[512]{0}', space=smem, size = 0x200, scoped, tag = 'input window, operand 0, single buffered']
    #allocation3 [shape = 's32[1]{0}', space=sflag, size = 0x4, scoped, tag = 'scoped memory for tpu_custom_call.1']
    #allocation4 [shape = 's32[1]{0}', space=sflag, size = 0x4, scoped, tag = 'scoped memory for tpu_custom_call.1']
    #allocation5 [shape = 'u8[2048]{0}', space=smem, size = 0x800, scoped, tag = 'input window, operand 1, single buffered']
    #allocation6 [shape = 's32[1]{0}', space=sflag, size = 0x4, scoped, tag = 'scoped memory for tpu_custom_call.1']
    #allocation7 [shape = 'u8[512]{0}', space=vmem, size = 0x400, scoped, tag = 'output window, operand 0, single buffered']
    #allocation8 [shape = 'u8[2048]{0}', space=vmem, size = 0x800, scoped, tag = 'output window, operand 1, single buffered']
    #allocation9 [shape = 's32[1]{0}', space=sflag, size = 0x4, scoped, tag = 'scoped memory for tpu_custom_call.1']
    #allocation10 [shape = 'u8[2048]{0}', space=vmem, size = 0x800, scoped, tag = 'output window, operand 3, single buffered']
    %13 = vsyncpa [#allocation4], 0
    %14 = vsyncpa [#allocation6], 0
    %15 = vsyncpa [#allocation3], 0
    %16 = vsyncpa [#allocation9], 0
    // Predicated region
    $region2: #{tpu_custom_call.1} parent=1 // pred_check
      _
    $region3: #{tpu_custom_call.1} parent=1 // pred_check_branch
      %18 = sbr.rel (0) target = $region5
    $region4: #{tpu_custom_call.1} parent=1 // pred_region
      %20 = vsyncadd [#allocation4], 0
      %s22 = sshll.u32 %s0, 4
      %s23 = int_to_ptr.vmem [resolvable:$true] %s22
      %25 = dma.vmem_to_smem %s23, 16, [#allocation2], [#allocation4]
    $region5: #{tpu_custom_call.1} parent=1 // pred_fallthru
      _
    // Predicated region
    $region6: #{tpu_custom_call.1} parent=1 // pred_check
      _
    $region7: #{tpu_custom_call.1} parent=1 // pred_check_branch
      %27 = sbr.rel (0) target = $region9
    $region8: #{tpu_custom_call.1} parent=1 // pred_region
      %29 = vsyncadd [#allocation6], 0
      %s31 = sshll.u32 %s1, 4
      %s32 = int_to_ptr.vmem [resolvable:$true] %s31
      %34 = dma.vmem_to_smem %s32, 64, [#allocation5], [#allocation6]
    $region9: #{tpu_custom_call.1} parent=1 // pred_fallthru
      _
    // Predicated region
    $region10: #{tpu_custom_call.1} parent=1 // pred_check
      _
    $region11: #{tpu_custom_call.1} parent=1 // pred_check_branch
      %36 = sbr.rel (0) target = $region13
    $region12: #{tpu_custom_call.1} parent=1 // pred_region
      _
    $region13: #{tpu_custom_call.1} parent=1 // pred_fallthru
      _
    // Predicated region
    $region14: #{tpu_custom_call.1} parent=1 // pred_check
      _
    $region15: #{tpu_custom_call.1} parent=1 // pred_check_branch
      %38 = sbr.rel (0) target = $region17
    $region16: #{tpu_custom_call.1} parent=1 // pred_region
      _
    $region17: #{tpu_custom_call.1} parent=1 // pred_fallthru
      _
    // Predicated region
    $region18: #{tpu_custom_call.1} parent=1 // pred_check
      _
    $region19: #{tpu_custom_call.1} parent=1 // pred_check_branch
      %40 = sbr.rel (0) target = $region21
    $region20: #{tpu_custom_call.1} parent=1 // pred_region
      %42 = dma.done [#allocation4], 16
    $region21: #{tpu_custom_call.1} parent=1 // pred_fallthru
      _
    // Predicated region
    $region22: #{tpu_custom_call.1} parent=1 // pred_check
      _
    $region23: #{tpu_custom_call.1} parent=1 // pred_check_branch
      %44 = sbr.rel (0) target = $region25
    $region24: #{tpu_custom_call.1} parent=1 // pred_region
      %46 = dma.done [#allocation6], 64
    $region25: #{tpu_custom_call.1} parent=1 // pred_fallthru
      _
    %47 = sfence
    %v48 = vld [vmem:[%s2] sm:$0xff]
    %v49 = vld [vmem:[%s2 + $0x8] sm:$0x1f]
    %v50 = vld [vmem:[%s3] sm:$0xff]
    %v51 = vld [vmem:[%s3 + $0x8] sm:$0x1f]
    %v52 = vmul.f32 %v49, %v49
    %v54 = vrot.slane %v52, 1
    %v56 = vadd.f32 %v52, %v54
    %v57 = vmul.f32 %v56, 2.0
    %v58 = vsub.f32 1.0, %v57
    %v60 = vrot.slane %v49, 1
    %v62 = vmul.f32 %v48, %v60
    %v64 = vrot.slane %v48, 5
    %v66 = vmul.f32 %v49, %v64
    %v68 = vrot.slane %v66, 2
    %v70 = vsub.f32 %v62, %v68
    %v71 = vmul.f32 %v70, 2.0
    %v72 = vrot.slane %v49, 2
    %v74 = vmul.f32 %v48, %v72
    %v75 = vrot.slane %v48, 6
    %v77 = vmul.f32 %v49, %v75
    %v79 = vrot.slane %v77, 1
    %v81 = vadd.f32 %v74, %v79
    %v82 = vmul.f32 %v81, 2.0
    %v83 = vadd.f32 %v62, %v68
    %v84 = vmul.f32 %v83, 2.0
    %v85 = vmul.f32 %v48, %v48
    %v86 = vrot.slane %v52, 2
    %v88 = vadd.f32 %v85, %v86
    %v89 = vmul.f32 %v88, 2.0
    %v90 = vsub.f32 1.0, %v89
    %v91 = vmul.f32 %v49, %v60
    %v92 = vrot.slane %v48, 7
    %v94 = vmul.f32 %v48, %v92
    %v96 = vrot.slane %v94, 7
    %v98 = vsub.f32 %v91, %v96
    %v99 = vmul.f32 %v98, 2.0
    %v100 = vsub.f32 %v74, %v79
    %v101 = vmul.f32 %v100, 2.0
    %v102 = vadd.f32 %v91, %v96
    %v103 = vmul.f32 %v102, 2.0
    %v104 = vadd.f32 %v85, %v54
    %v105 = vmul.f32 %v104, 2.0
    %v106 = vsub.f32 1.0, %v105
    %s107 = sld [smem:[#allocation2]]
    %s108 = sld [smem:[#allocation2 + $0x1]]
    %s109 = sld [smem:[#allocation2 + $0x4]]
    %v110 = vsub.f32 %v48, %v50
    %v111 = vadd.f32 %v51, 9.81
    %v112 = vstv %s107
    %v113 = vmul.f32 %v112, %v110
    %v115 = vrot.slane %v113, 2
    %v117 = vsub.f32 %v50, %v115
    %v118 = vstv %s108
    %v119 = vmul.f32 %v118, %v110
    %v121 = vrot.slane %v119, 5
    %v123 = vsub.f32 %v117, %v121
    %v124 = vsub.f32 %v111, %v115
    %v125 = vsub.f32 %v124, %v121
    %v127 = vrot.slane %v82, 1
    %v129 = vmul.f32 %v123, %v127
    %v131 = vrot.slane %v99, 1
    %v133 = vmul.f32 %v123, %v131
    %v135 = vrot.slane %v133, 1
    %v137 = vadd.f32 %v129, %v135
    %v139 = vrot.slane %v106, 7
    %v141 = vmul.f32 %v125, %v139
    %v143 = vrot.slane %v141, 2
    %v145 = vadd.f32 %v137, %v143
    %v146 = vstv %s109
    %v147 = vmul.f32 %v146, %v145
    %v148 = vmul.f32 %v123, %v123
    %v150 = vrot.slane %v148, 1
    %v152 = vadd.f32 %v148, %v150
    %v153 = vmul.f32 %v125, %v125
    %v155 = vrot.slane %v153, 2
    %v157 = vadd.f32 %v152, %v155
    %vm158 = vcmp.gt.f32.partialorder %v157, 0.0
    %v159 = vsel %vm158, %v157, 1.0
    %v160 = vrsqrt.pop %v159
    %v161 = vmul.f32 %v160, %v159
    %v162 = vmul.f32 %v161, %v160
    %v163 = vmul.f32 0.5, %v162
    %v164 = vsub.f32 1.5, %v163
    %v165 = vmul.f32 %v160, %v164
    %vm166 = vweird.f32 %v159
    %vm167 = vweird.f32 %v160
    %vm168 = vmor %vm166, %vm167
    %v169 = vsel %vm168, %v160, %v165
    %v170 = vmul.f32 %v123, %v169
    %v171 = vsel %vm158, %v170, 0.0
    %v173 = vrot.slane %v169, 7
    %v175 = vmul.f32 %v123, %v173
    %v177 = vrot.slane %v175, 1
    %v179 = vsel %vm158, %v177, 0.0
    %v180 = vrot.slane %v169, 6
    %v182 = vmul.f32 %v125, %v180
    %v184 = vrot.slane %v182, 2
    %v186 = vsel %vm158, %v184, 1.0
    %v187 = vand.u32 2147483647, %v51
    %vm188 = vcmp.le.f32.partialorder %v187, 0.7853982
    %vm189 = vcmp.lt.s32.totalorder %v51, 0
    %v190 = vand.u32 %v51, 2139095040
    %v191 = vshrl.u32 %v190, 23
    %v192 = vsub.s32 %v191, 127
    %v193 = vand.u32 2147483647, %v51
    %v194 = vand.u32 %v193, 8388607
    %v195 = vor.u32 %v194, 8388608
    %v196 = vsub.s32 0, %v195
    %v197 = vadd.s32 %v192, 1
    %vm198 = vcmp.gt.s32.totalorder %v197, 0
    %v199 = vsel %vm198, %v197, 0
    %v200 = vshrl.u32 %v199, 5
    %v201 = vand.u32 %v199, 31
    %v202 = vsub.s32 32, %v201
    %v203 = vshrl.u32 683565275, %v202
    %v204 = vshll.u32 683565275, %v201
    %v205 = vshrl.u32 2475754826, %v202
    %v206 = vor.u32 %v204, %v205
    %v207 = vshll.u32 2475754826, %v201
    %v208 = vshrl.u32 2131351028, %v202
    %v209 = vor.u32 %v207, %v208
    %v210 = vshll.u32 2131351028, %v201
    %v211 = vshrl.u32 2102212464, %v202
    %v212 = vor.u32 %v210, %v211
    %v213 = vshll.u32 2102212464, %v201
    %v214 = vshrl.u32 920167782, %v202
    %v215 = vor.u32 %v213, %v214
    %v216 = vshll.u32 920167782, %v201
    %v217 = vshrl.u32 1326507024, %v202
    %v218 = vor.u32 %v216, %v217
    %vm219 = vcmp.lt.s32.totalorder %v200, 1
    %vm220 = vcmp.lt.s32.totalorder %v200, 2
    %vm221 = vcmp.lt.s32.totalorder %v200, 3
    %vm222 = vcmp.lt.s32.totalorder %v200, 4
    %v223 = vsel %vm219, %v203, %v206
    %v224 = vsel %vm222, %v212, 2102212464
    %v225 = vsel %vm221, %v209, %v224
    %v226 = vsel %vm220, %v223, %v225
    %v227 = vsel %vm219, %v206, %v209
    %v228 = vsel %vm222, %v215, 920167782
    %v229 = vsel %vm221, %v212, %v228
    %v230 = vsel %vm220, %v227, %v229
    %v231 = vsel %vm219, %v209, %v212
    %v232 = vsel %vm222, %v218, 1326507024
    %v233 = vsel %vm221, %v215, %v232
    %v234 = vsel %vm220, %v231, %v233
    %v235 = vshll.u32 %v195, 8
    %v236 = vand.u32 %v235, 65535
    %v237 = vshrl.u32 %v235, 16
    %v238 = vand.u32 %v234, 65535
    %v239 = vshrl.u32 %v234, 16
    %v240 = vmul.u32 %v236, %v238
    %v241 = vmul.u32 %v236, %v239
    %v242 = vmul.u32 %v237, %v238
    %v243 = vmul.u32 %v237, %v239
    %v244 = vshll.u32 %v241, 16
    %v245 = vshrl.u32 %v241, 16
    %v246 = vshll.u32 %v242, 16
    %v247 = vshrl.u32 %v242, 16
    %vm248 = vc.u32 %v240, %v244
    %v249 = vsel %vm248, 1, 0
    %v250 = vadd.s32 %v240, %v244
    %v251 = vadd.s32 %v243, %v249
    %vm252 = vc.u32 %v250, %v246
    %v253 = vsel %vm252, 1, 0
    %v254 = vadd.s32 %v250, %v246
    %v255 = vadd.s32 %v251, %v253
    %v256 = vadd.s32 %v255, %v245
    %v257 = vadd.s32 %v256, %v247
    %v258 = vand.u32 %v235, 65535
    %v259 = vshrl.u32 %v235, 16
    %v260 = vand.u32 %v230, 65535
    %v261 = vshrl.u32 %v230, 16
    %v262 = vmul.u32 %v258, %v260
    %v263 = vmul.u32 %v258, %v261
    %v264 = vmul.u32 %v259, %v260
    %v265 = vmul.u32 %v259, %v261
    %v266 = vshll.u32 %v263, 16
    %v267 = vshrl.u32 %v263, 16
    %v268 = vshll.u32 %v264, 16
    %v269 = vshrl.u32 %v264, 16
    %vm270 = vc.u32 %v262, %v266
    %v271 = vsel %vm270, 1, 0
    %v272 = vadd.s32 %v262, %v266
    %v273 = vadd.s32 %v265, %v271
    %vm274 = vc.u32 %v272, %v268
    %v275 = vsel %vm274, 1, 0
    %v276 = vadd.s32 %v272, %v268
    %v277 = vadd.s32 %v273, %v275
    %v278 = vadd.s32 %v277, %v267
    %v279 = vadd.s32 %v278, %v269
    %v280 = vmul.u32 %v235, %v226
    %v281 = vadd.s32 %v257, %v276
    %vm282 = vc.u32 %v257, %v276
    %v283 = vadd.s32 %v279, 1
    %v284 = vsel %vm282, %v283, %v279
    %v285 = vadd.s32 %v280, %v284
    %v286 = vadd.s32 %v285, 536870912
    %v287 = vshrl.u32 %v286, 30
    %v288 = vshll.u32 %v287, 30
    %v289 = vsub.s32 %v285, %v288
    %vm290 = vcmp.lt.s32.totalorder %v289, 0
    %v291 = vsub.s32 0, %v289
    %v292 = vsel %vm290, %v291, %v289
    %v293 = vclz %v292
    %v294 = vsub.s32 %v293, 2
    %vm295 = vcmp.gt.s32.totalorder 0, %v294
    %v296 = vsel %vm295, 0, %v294
    %v297 = vsub.s32 32, %v296
    %v298 = vshll.u32 %v289, %v296
    %v299 = vshrl.u32 %v281, %v297
    %v300 = vor.u32 %v298, %v299
    %v301 = vsub.s32 4294967266, %v296
    %v302 = vadd.s32 %v301, 127
    %v303 = vshll.u32 %v302, 23
    %v304 = vor.u32 4788187, %v303
    %v305 = vand.u32 2147483647, %v304
    %v307 = vcvt.s32.f32 %v300
    %v308 = vmul.f32 %v307, %v305
    %v309 = vxor.u32 %v308, 2147483648
    %v310 = vsel %vm189, %v309, %v308
    %v311 = vsub.s32 4, %v287
    %v312 = vsel %vm189, %v311, %v287
    %v313 = vsel %vm188, %v51, %v310
    %v314 = vsel %vm188, 0, %v312
    %v315 = vmul.f32 %v313, %v313
    %v316 = vmul.f32 %v315, -0.001358992
    %v317 = vadd.f32 %v316, 0.041655596
    %v318 = vmul.f32 %v315, %v317
    %v319 = vadd.f32 %v318, -0.4999988
    %v320 = vmul.f32 %v315, %v319
    %v321 = vadd.f32 1.0, %v320
    %v322 = vmul.f32 %v313, %v313
    %v323 = vmul.f32 %v322, -0.00019511016
    %v324 = vadd.f32 %v323, 0.008332121
    %v325 = vmul.f32 %v322, %v324
    %v326 = vadd.f32 %v325, -0.16666654
    %v327 = vmul.f32 %v322, %v326
    %v328 = vadd.f32 %v327, 1.0
    %v329 = vmul.f32 %v328, %v313
    %vm330 = vweird.f32 %v51
    %v331 = vand.u32 %v314, 3
    %vm332 = vcmp.lt.s32.totalorder %v331, 2
    %vm333 = vcmp.eq.s32.totalorder %v331, 0
    %v334 = vxor.u32 %v329, 2147483648
    %v335 = vsel %vm333, %v321, %v334
    %vm336 = vcmp.eq.s32.totalorder %v331, 2
    %v337 = vxor.u32 %v321, 2147483648
    %v338 = vsel %vm336, %v337, %v329
    %v339 = vsel %vm332, %v335, %v338
    %v340 = vsel %vm330, nan, %v339
    %v341 = vand.u32 2147483647, %v51
    %vm342 = vcmp.le.f32.partialorder %v341, 0.7853982
    %vm343 = vcmp.lt.s32.totalorder %v51, 0
    %v344 = vand.u32 %v51, 2139095040
    %v345 = vshrl.u32 %v344, 23
    %v346 = vsub.s32 %v345, 127
    %v347 = vand.u32 2147483647, %v51
    %v348 = vand.u32 %v347, 8388607
    %v349 = vor.u32 %v348, 8388608
    %v350 = vsub.s32 0, %v349
    %v351 = vadd.s32 %v346, 1
    %vm352 = vcmp.gt.s32.totalorder %v351, 0
    %v353 = vsel %vm352, %v351, 0
    %v354 = vshrl.u32 %v353, 5
    %v355 = vand.u32 %v353, 31
    %v356 = vsub.s32 32, %v355
    %v357 = vshrl.u32 683565275, %v356
    %v358 = vshll.u32 683565275, %v355
    %v359 = vshrl.u32 2475754826, %v356
    %v360 = vor.u32 %v358, %v359
    %v361 = vshll.u32 2475754826, %v355
    %v362 = vshrl.u32 2131351028, %v356
    %v363 = vor.u32 %v361, %v362
    %v364 = vshll.u32 2131351028, %v355
    %v365 = vshrl.u32 2102212464, %v356
    %v366 = vor.u32 %v364, %v365
    %v367 = vshll.u32 2102212464, %v355
    %v368 = vshrl.u32 920167782, %v356
    %v369 = vor.u32 %v367, %v368
    %v370 = vshll.u32 920167782, %v355
    %v371 = vshrl.u32 1326507024, %v356
    %v372 = vor.u32 %v370, %v371
    %vm373 = vcmp.lt.s32.totalorder %v354, 1
    %vm374 = vcmp.lt.s32.totalorder %v354, 2
    %vm375 = vcmp.lt.s32.totalorder %v354, 3
    %vm376 = vcmp.lt.s32.totalorder %v354, 4
    %v377 = vsel %vm373, %v357, %v360
    %v378 = vsel %vm376, %v366, 2102212464
    %v379 = vsel %vm375, %v363, %v378
    %v380 = vsel %vm374, %v377, %v379
    %v381 = vsel %vm373, %v360, %v363
    %v382 = vsel %vm376, %v369, 920167782
    %v383 = vsel %vm375, %v366, %v382
    %v384 = vsel %vm374, %v381, %v383
    %v385 = vsel %vm373, %v363, %v366
    %v386 = vsel %vm376, %v372, 1326507024
    %v387 = vsel %vm375, %v369, %v386
    %v388 = vsel %vm374, %v385, %v387
    %v389 = vshll.u32 %v349, 8
    %v390 = vand.u32 %v389, 65535
    %v391 = vshrl.u32 %v389, 16
    %v392 = vand.u32 %v388, 65535
    %v393 = vshrl.u32 %v388, 16
    %v394 = vmul.u32 %v390, %v392
    %v395 = vmul.u32 %v390, %v393
    %v396 = vmul.u32 %v391, %v392
    %v397 = vmul.u32 %v391, %v393
    %v398 = vshll.u32 %v395, 16
    %v399 = vshrl.u32 %v395, 16
    %v400 = vshll.u32 %v396, 16
    %v401 = vshrl.u32 %v396, 16
    %vm402 = vc.u32 %v394, %v398
    %v403 = vsel %vm402, 1, 0
    %v404 = vadd.s32 %v394, %v398
    %v405 = vadd.s32 %v397, %v403
    %vm406 = vc.u32 %v404, %v400
    %v407 = vsel %vm406, 1, 0
    %v408 = vadd.s32 %v404, %v400
    %v409 = vadd.s32 %v405, %v407
    %v410 = vadd.s32 %v409, %v399
    %v411 = vadd.s32 %v410, %v401
    %v412 = vand.u32 %v389, 65535
    %v413 = vshrl.u32 %v389, 16
    %v414 = vand.u32 %v384, 65535
    %v415 = vshrl.u32 %v384, 16
    %v416 = vmul.u32 %v412, %v414
    %v417 = vmul.u32 %v412, %v415
    %v418 = vmul.u32 %v413, %v414
    %v419 = vmul.u32 %v413, %v415
    %v420 = vshll.u32 %v417, 16
    %v421 = vshrl.u32 %v417, 16
    %v422 = vshll.u32 %v418, 16
    %v423 = vshrl.u32 %v418, 16
    %vm424 = vc.u32 %v416, %v420
    %v425 = vsel %vm424, 1, 0
    %v426 = vadd.s32 %v416, %v420
    %v427 = vadd.s32 %v419, %v425
    %vm428 = vc.u32 %v426, %v422
    %v429 = vsel %vm428, 1, 0
    %v430 = vadd.s32 %v426, %v422
    %v431 = vadd.s32 %v427, %v429
    %v432 = vadd.s32 %v431, %v421
    %v433 = vadd.s32 %v432, %v423
    %v434 = vmul.u32 %v389, %v380
    %v435 = vadd.s32 %v411, %v430
    %vm436 = vc.u32 %v411, %v430
    %v437 = vadd.s32 %v433, 1
    %v438 = vsel %vm436, %v437, %v433
    %v439 = vadd.s32 %v434, %v438
    %v440 = vadd.s32 %v439, 536870912
    %v441 = vshrl.u32 %v440, 30
    %v442 = vshll.u32 %v441, 30
    %v443 = vsub.s32 %v439, %v442
    %vm444 = vcmp.lt.s32.totalorder %v443, 0
    %v445 = vsub.s32 0, %v443
    %v446 = vsel %vm444, %v445, %v443
    %v447 = vclz %v446
    %v448 = vsub.s32 %v447, 2
    %vm449 = vcmp.gt.s32.totalorder 0, %v448
    %v450 = vsel %vm449, 0, %v448
    %v451 = vsub.s32 32, %v450
    %v452 = vshll.u32 %v443, %v450
    %v453 = vshrl.u32 %v435, %v451
    %v454 = vor.u32 %v452, %v453
    %v455 = vsub.s32 4294967266, %v450
    %v456 = vadd.s32 %v455, 127
    %v457 = vshll.u32 %v456, 23
    %v458 = vor.u32 4788187, %v457
    %v459 = vand.u32 2147483647, %v458
    %v461 = vcvt.s32.f32 %v454
    %v462 = vmul.f32 %v461, %v459
    %v463 = vxor.u32 %v462, 2147483648
    %v464 = vsel %vm343, %v463, %v462
    %v465 = vsub.s32 4, %v441
    %v466 = vsel %vm343, %v465, %v441
    %v467 = vsel %vm342, %v51, %v464
    %v468 = vsel %vm342, 0, %v466
    %v469 = vmul.f32 %v467, %v467
    %v470 = vmul.f32 %v469, -0.001358992
    %v471 = vadd.f32 %v470, 0.041655596
    %v472 = vmul.f32 %v469, %v471
    %v473 = vadd.f32 %v472, -0.4999988
    %v474 = vmul.f32 %v469, %v473
    %v475 = vadd.f32 1.0, %v474
    %v476 = vmul.f32 %v467, %v467
    %v477 = vmul.f32 %v476, -0.00019511016
    %v478 = vadd.f32 %v477, 0.008332121
    %v479 = vmul.f32 %v476, %v478
    %v480 = vadd.f32 %v479, -0.16666654
    %v481 = vmul.f32 %v476, %v480
    %v482 = vadd.f32 %v481, 1.0
    %v483 = vmul.f32 %v482, %v467
    %vm484 = vweird.f32 %v51
    %v485 = vadd.s32 %v468, 3
    %v486 = vand.u32 %v485, 3
    %vm487 = vcmp.lt.s32.totalorder %v486, 2
    %vm488 = vcmp.eq.s32.totalorder %v486, 0
    %v489 = vxor.u32 %v483, 2147483648
    %v490 = vsel %vm488, %v475, %v489
    %vm491 = vcmp.eq.s32.totalorder %v486, 2
    %v492 = vxor.u32 %v475, 2147483648
    %v493 = vsel %vm491, %v492, %v483
    %v494 = vsel %vm487, %v490, %v493
    %v495 = vsel %vm484, nan, %v494
    %v496 = vmul.f32 %v179, 0.0
    %v498 = vrot.slane %v495, 6
    %v500 = vmul.f32 %v186, %v498
    %v501 = vsub.f32 %v496, %v500
    %v503 = vrot.slane %v340, 6
    %v505 = vmul.f32 %v186, %v503
    %v506 = vmul.f32 %v171, 0.0
    %v507 = vsub.f32 %v505, %v506
    %v508 = vmul.f32 %v171, %v498
    %v509 = vmul.f32 %v179, %v503
    %v510 = vsub.f32 %v508, %v509
    %v511 = vmul.f32 %v501, %v501
    %v512 = vmul.f32 %v507, %v507
    %v513 = vadd.f32 %v511, %v512
    %v514 = vmul.f32 %v510, %v510
    %v515 = vadd.f32 %v513, %v514
    %vm516 = vcmp.gt.f32.partialorder %v515, 0.0
    %v517 = vsel %vm516, %v515, 1.0
    %v518 = vrsqrt.pop %v517
    %v519 = vmul.f32 %v518, %v517
    %v520 = vmul.f32 %v519, %v518
    %v521 = vmul.f32 0.5, %v520
    %v522 = vsub.f32 1.5, %v521
    %v523 = vmul.f32 %v518, %v522
    %vm524 = vweird.f32 %v517
    %vm525 = vweird.f32 %v518
    %vm526 = vmor %vm524, %vm525
    %v527 = vsel %vm526, %v518, %v523
    %v528 = vmul.f32 %v501, %v527
    %v529 = vsel %vm516, %v528, 0.0
    %v530 = vmul.f32 %v507, %v527
    %v531 = vsel %vm516, %v530, 1.0
    %v532 = vmul.f32 %v510, %v527
    %v533 = vsel %vm516, %v532, 0.0
    %v534 = vmul.f32 %v531, %v186
    %v535 = vmul.f32 %v533, %v179
    %v536 = vsub.f32 %v534, %v535
    %v537 = vmul.f32 %v533, %v171
    %v538 = vmul.f32 %v529, %v186
    %v539 = vsub.f32 %v537, %v538
    %v540 = vmul.f32 %v529, %v179
    %v541 = vmul.f32 %v531, %v171
    %v542 = vsub.f32 %v540, %v541
    %v544 = vrot.slane %v71, 1
    %v546 = vmul.f32 %v171, %v544
    %v548 = vrot.slane %v90, 1
    %v550 = vmul.f32 %v179, %v548
    %v551 = vadd.f32 %v546, %v550
    %v553 = vrot.slane %v103, 2
    %v555 = vmul.f32 %v186, %v553
    %v556 = vadd.f32 %v551, %v555
    %v557 = vmul.f32 %v529, %v127
    %v558 = vrot.slane %v99, 2
    %v560 = vmul.f32 %v531, %v558
    %v561 = vadd.f32 %v557, %v560
    %v562 = vrot.slane %v106, 1
    %v564 = vmul.f32 %v533, %v562
    %v565 = vadd.f32 %v561, %v564
    %v566 = vmul.f32 %v536, %v127
    %v567 = vmul.f32 %v539, %v558
    %v568 = vadd.f32 %v566, %v567
    %v569 = vmul.f32 %v542, %v562
    %v570 = vadd.f32 %v568, %v569
    %v572 = vrot.slane %v58, 2
    %v574 = vmul.f32 %v171, %v572
    %v576 = vrot.slane %v84, 1
    %v578 = vmul.f32 %v179, %v576
    %v579 = vadd.f32 %v574, %v578
    %v581 = vrot.slane %v101, 1
    %v583 = vmul.f32 %v186, %v581
    %v584 = vadd.f32 %v579, %v583
    %v585 = vmul.f32 %v529, %v572
    %v586 = vmul.f32 %v531, %v576
    %v587 = vadd.f32 %v585, %v586
    %v588 = vmul.f32 %v533, %v581
    %v589 = vadd.f32 %v587, %v588
    %v590 = vmul.f32 %v536, %v544
    %v591 = vmul.f32 %v539, %v548
    %v592 = vadd.f32 %v590, %v591
    %v593 = vmul.f32 %v542, %v553
    %v594 = vadd.f32 %v592, %v593
    %v595 = vsub.f32 %v556, %v565
    %v596 = vmul.f32 %v595, 0.5
    %v597 = vsub.f32 %v570, %v584
    %v598 = vmul.f32 %v597, 0.5
    %v599 = vsub.f32 %v589, %v594
    %v600 = vmul.f32 %v599, 0.5
    %vm601 = vcmp.eq.f32.partialorder %v147, 0.0
    %v602 = vsel %vm601, 1.0, %v147
    %v603 = vrcp.pop %v602
    %v604 = vmul.f32 %v602, %v603
    %v605 = vsub.f32 1.0, %v604
    %v606 = vmul.f32 %v603, %v605
    %v607 = vadd.f32 %v603, %v606
    %vm608 = vweird.f32 %v602
    %vm609 = vweird.f32 %v603
    %vm610 = vmor %vm608, %vm609
    %v611 = vsel %vm610, %v603, %v607
    %v612 = vand.u32 2147483647, %v602
    %vm613 = vcmp.eq.f32.partialorder %v612, 8.507059e+37
    %v614 = vand.u32 %v602, 2147483648
    %v615 = vor.u32 1.1754944e-38, %v614
    %v616 = vsel %vm613, %v615, %v611
    %v617 = vmul.f32 %v146, %v616
    %v618 = vsel %vm601, 0.0, %v617
    %v620 = vrot.slane %v51, 3
    %v622 = vmul.f32 %v171, %v620
    %v623 = vrot.slane %v51, 4
    %v625 = vmul.f32 %v179, %v623
    %v626 = vadd.f32 %v622, %v625
    %v627 = vrot.slane %v51, 5
    %v629 = vmul.f32 %v186, %v627
    %v630 = vadd.f32 %v626, %v629
    %v631 = vmul.f32 %v630, %v171
    %v633 = vrot.slane %v631, 5
    %v635 = vsub.f32 %v51, %v633
    %v637 = vrot.slane %v635, 3
    %v639 = vmul.f32 %v618, %v637
    %v640 = vmul.f32 %v630, %v179
    %v642 = vrot.slane %v640, 4
    %v644 = vsub.f32 %v51, %v642
    %v646 = vrot.slane %v644, 4
    %v648 = vmul.f32 %v618, %v646
    %v649 = vmul.f32 %v630, %v186
    %v651 = vrot.slane %v649, 3
    %v653 = vsub.f32 %v51, %v651
    %v655 = vrot.slane %v653, 5
    %v657 = vmul.f32 %v618, %v655
    %v658 = vmul.f32 %v639, %v529
    %v659 = vmul.f32 %v648, %v531
    %v660 = vadd.f32 %v658, %v659
    %v661 = vmul.f32 %v657, %v533
    %v662 = vadd.f32 %v660, %v661
    %v663 = vsub.f32 0.0, %v662
    %v664 = vmul.f32 %v639, %v536
    %v665 = vmul.f32 %v648, %v539
    %v666 = vadd.f32 %v664, %v665
    %v667 = vmul.f32 %v657, %v542
    %v668 = vadd.f32 %v666, %v667
    %v669 = vmul.f32 %v663, %v536
    %v670 = vmul.f32 %v668, %v529
    %v671 = vadd.f32 %v669, %v670
    %v672 = vmul.f32 %v663, %v539
    %v673 = vmul.f32 %v668, %v531
    %v674 = vadd.f32 %v672, %v673
    %v675 = vmul.f32 %v663, %v542
    %v676 = vmul.f32 %v668, %v533
    %v677 = vadd.f32 %v675, %v676
    %v679 = vrot.slane %v671, 6
    %v681 = vmul.f32 %v58, %v679
    %v683 = vrot.slane %v674, 7
    %v685 = vmul.f32 %v84, %v683
    %v687 = vrot.slane %v685, 7
    %v689 = vadd.f32 %v681, %v687
    %v691 = vrot.slane %v677, 7
    %v693 = vmul.f32 %v101, %v691
    %v695 = vrot.slane %v693, 7
    %v697 = vadd.f32 %v689, %v695
    %v698 = vrot.slane %v671, 7
    %v700 = vmul.f32 %v71, %v698
    %v701 = vmul.f32 %v90, %v683
    %v702 = vadd.f32 %v700, %v701
    %v703 = vrot.slane %v677, 6
    %v705 = vmul.f32 %v103, %v703
    %v707 = vrot.slane %v705, 1
    %v709 = vadd.f32 %v702, %v707
    %v710 = vmul.f32 %v82, %v698
    %v711 = vrot.slane %v674, 6
    %v713 = vmul.f32 %v99, %v711
    %v715 = vrot.slane %v713, 1
    %v717 = vadd.f32 %v710, %v715
    %v718 = vmul.f32 %v106, %v691
    %v719 = vadd.f32 %v717, %v718
    %v721 = vrot.slane %v697, 6
    %v723 = vsub.f32 %v49, %v721
    %v725 = vrot.slane %v709, 4
    %v727 = vsub.f32 %v49, %v725
    %v729 = vrot.slane %v719, 3
    %v731 = vsub.f32 %v49, %v729
    %s732 = sld [smem:[#allocation2 + $0x2]]
    %s733 = sld [smem:[#allocation2 + $0x3]]
    %s734 = sld [smem:[#allocation5]]
    %s735 = sld [smem:[#allocation5 + $0x1]]
    %s736 = sld [smem:[#allocation5 + $0x2]]
    %s737 = sld [smem:[#allocation5 + $0x80]]
    %s738 = sld [smem:[#allocation5 + $0x81]]
    %s739 = sld [smem:[#allocation5 + $0x82]]
    %s740 = sld [smem:[#allocation5 + $0x100]]
    %s741 = sld [smem:[#allocation5 + $0x101]]
    %s742 = sld [smem:[#allocation5 + $0x102]]
    %v743 = vstv %s734
    %v744 = vmul.f32 %v743, %v49
    %v745 = vstv %s735
    %v746 = vmul.f32 %v745, %v49
    %v748 = vrot.slane %v746, 1
    %v750 = vadd.f32 %v744, %v748
    %v751 = vstv %s736
    %v752 = vmul.f32 %v751, %v49
    %v754 = vrot.slane %v752, 2
    %v756 = vadd.f32 %v750, %v754
    %v757 = vstv %s737
    %v758 = vmul.f32 %v757, %v49
    %v759 = vstv %s738
    %v760 = vmul.f32 %v759, %v49
    %v762 = vrot.slane %v760, 1
    %v764 = vadd.f32 %v758, %v762
    %v765 = vstv %s739
    %v766 = vmul.f32 %v765, %v49
    %v768 = vrot.slane %v766, 2
    %v770 = vadd.f32 %v764, %v768
    %v771 = vstv %s740
    %v772 = vmul.f32 %v771, %v49
    %v773 = vstv %s741
    %v774 = vmul.f32 %v773, %v49
    %v776 = vrot.slane %v774, 1
    %v778 = vadd.f32 %v772, %v776
    %v779 = vstv %s742
    %v780 = vmul.f32 %v779, %v49
    %v782 = vrot.slane %v780, 2
    %v784 = vadd.f32 %v778, %v782
    %v786 = vrot.slane %v784, 7
    %v788 = vmul.f32 %v49, %v786
    %v790 = vrot.slane %v770, 6
    %v792 = vmul.f32 %v49, %v790
    %v794 = vrot.slane %v792, 1
    %v796 = vsub.f32 %v788, %v794
    %v798 = vrot.slane %v756, 6
    %v800 = vmul.f32 %v49, %v798
    %v801 = vmul.f32 %v49, %v784
    %v803 = vrot.slane %v801, 6
    %v805 = vsub.f32 %v800, %v803
    %v806 = vmul.f32 %v49, %v770
    %v807 = vrot.slane %v756, 7
    %v809 = vmul.f32 %v49, %v807
    %v811 = vrot.slane %v809, 1
    %v813 = vsub.f32 %v806, %v811
    %v814 = vrot.slane %v719, 4
    %v816 = vmul.f32 %v49, %v814
    %v817 = vrot.slane %v709, 3
    %v819 = vmul.f32 %v49, %v817
    %v821 = vrot.slane %v819, 1
    %v823 = vsub.f32 %v816, %v821
    %v824 = vrot.slane %v697, 4
    %v826 = vmul.f32 %v49, %v824
    %v827 = vrot.slane %v719, 5
    %v829 = vmul.f32 %v49, %v827
    %v831 = vrot.slane %v829, 6
    %v833 = vsub.f32 %v826, %v831
    %v834 = vrot.slane %v709, 5
    %v836 = vmul.f32 %v49, %v834
    %v837 = vrot.slane %v697, 5
    %v839 = vmul.f32 %v49, %v837
    %v841 = vrot.slane %v839, 1
    %v843 = vsub.f32 %v836, %v841
    %v844 = vmul.f32 %v743, %v823
    %v845 = vmul.f32 %v745, %v833
    %v847 = vrot.slane %v845, 1
    %v849 = vadd.f32 %v844, %v847
    %v850 = vmul.f32 %v751, %v843
    %v852 = vrot.slane %v850, 7
    %v854 = vadd.f32 %v849, %v852
    %v855 = vmul.f32 %v757, %v823
    %v856 = vmul.f32 %v759, %v833
    %v858 = vrot.slane %v856, 1
    %v860 = vadd.f32 %v855, %v858
    %v861 = vmul.f32 %v765, %v843
    %v863 = vrot.slane %v861, 7
    %v865 = vadd.f32 %v860, %v863
    %v866 = vmul.f32 %v771, %v823
    %v867 = vmul.f32 %v773, %v833
    %v869 = vrot.slane %v867, 1
    %v871 = vadd.f32 %v866, %v869
    %v872 = vmul.f32 %v779, %v843
    %v874 = vrot.slane %v872, 7
    %v876 = vadd.f32 %v871, %v874
    %s877 = ssub.f32 0.0, %s733
    %v878 = vstv %s877
    %v879 = vmul.f32 %v878, %v596
    %v880 = vstv %s732
    %v881 = vmul.f32 %v880, %v723
    %v883 = vrot.slane %v881, 4
    %v885 = vsub.f32 %v879, %v883
    %v887 = vrot.slane %v796, 5
    %v889 = vadd.f32 %v885, %v887
    %v891 = vrot.slane %v854, 5
    %v893 = vsub.f32 %v889, %v891
    %v894 = vmul.f32 %v878, %v598
    %v895 = vmul.f32 %v880, %v727
    %v897 = vrot.slane %v895, 5
    %v899 = vsub.f32 %v894, %v897
    %v901 = vrot.slane %v805, 6
    %v903 = vadd.f32 %v899, %v901
    %v905 = vrot.slane %v865, 5
    %v907 = vsub.f32 %v903, %v905
    %v908 = vmul.f32 %v878, %v600
    %v909 = vmul.f32 %v880, %v731
    %v911 = vrot.slane %v909, 6
    %v913 = vsub.f32 %v908, %v911
    %v915 = vrot.slane %v813, 4
    %v917 = vadd.f32 %v913, %v915
    %v919 = vrot.slane %v876, 5
    %v921 = vsub.f32 %v917, %v919
    %vm922 = vcmask 63494
    %923 = vst.msk [vmem:[#allocation7 - $0x6] sm:$0x40] %vm922, %v147
    %924 = vst.msk [vmem:[#allocation8 - $0x6] sm:$0x40] %vm922, %v893
    %925 = vst.msk [vmem:[#allocation10 - $0x6] sm:$0x40] %vm922, %v663
    %926 = vst.msk [vmem:[#allocation8 - $0x5] sm:$0x40] %vm922, %v907
    %927 = vst.msk [vmem:[#allocation10 - $0x5] sm:$0x40] %vm922, %v668
    %928 = vst.msk [vmem:[#allocation8 - $0x4] sm:$0x40] %vm922, %v921
    %vm929 = vcmask 57344
    %930 = vst.msk [vmem:[#allocation10 + $0x2] sm:$0x1] %vm929, 0.0
    %931 = vst.msk [vmem:[%s6 - $0x6] sm:$0x40] %vm922, %v536
    %932 = vst.msk [vmem:[%s6 - $0x5] sm:$0x40] %vm922, %v529
    %933 = vst.msk [vmem:[%s6 - $0x4] sm:$0x40] %vm922, %v171
    %934 = vst.msk [vmem:[%s6 - $0x3] sm:$0x40] %vm922, %v539
    %935 = vst.msk [vmem:[%s6 - $0x2] sm:$0x40] %vm922, %v531
    %936 = vst.msk [vmem:[%s6 - $0x1] sm:$0x40] %vm922, %v179
    %937 = vst.msk [vmem:[%s6] sm:$0x40] %vm922, %v542
    %938 = vst.msk [vmem:[%s6 + $0x1] sm:$0x40] %vm922, %v533
    %939 = vst.msk [vmem:[%s6 + $0x2] sm:$0x40] %vm922, %v186
    // Predicated region
    $region26: #{tpu_custom_call.1} parent=1 // pred_check
      _
    $region27: #{tpu_custom_call.1} parent=1 // pred_check_branch
      %941 = sbr.rel (0) target = $region29
    $region28: #{tpu_custom_call.1} parent=1 // pred_region
      %943 = vsyncadd [#allocation3], 0
      %s945 = sshll.u32 [#allocation7], 4
      %s946 = int_to_ptr.vmem [resolvable:$true] %s945
      %s947 = sshll.u32 %s4, 4
      %s948 = int_to_ptr.hbm [resolvable:$true] %s947
      %950 = dma.vmem_to_hbm [thread:$0]  %s946, 16, %s948, [#allocation3]
    $region29: #{tpu_custom_call.1} parent=1 // pred_fallthru
      _
    // Predicated region
    $region30: #{tpu_custom_call.1} parent=1 // pred_check
      _
    $region31: #{tpu_custom_call.1} parent=1 // pred_check_branch
      %952 = sbr.rel (0) target = $region33
    $region32: #{tpu_custom_call.1} parent=1 // pred_region
      %954 = vsyncadd [#allocation9], 0
      %s956 = sshll.u32 [#allocation8], 4
      %s957 = int_to_ptr.vmem [resolvable:$true] %s956
      %s958 = sshll.u32 %s5, 4
      %s959 = int_to_ptr.hbm [resolvable:$true] %s958
      %961 = dma.vmem_to_hbm [thread:$0]  %s957, 64, %s959, [#allocation9]
    $region33: #{tpu_custom_call.1} parent=1 // pred_fallthru
      _
    // Predicated region
    $region34: #{tpu_custom_call.1} parent=1 // pred_check
      _
    $region35: #{tpu_custom_call.1} parent=1 // pred_check_branch
      %963 = sbr.rel (0) target = $region37
    $region36: #{tpu_custom_call.1} parent=1 // pred_region
      _
    $region37: #{tpu_custom_call.1} parent=1 // pred_fallthru
      _
    // Predicated region
    $region38: #{tpu_custom_call.1} parent=1 // pred_check
      _
    $region39: #{tpu_custom_call.1} parent=1 // pred_check_branch
      %965 = sbr.rel (0) target = $region41
    $region40: #{tpu_custom_call.1} parent=1 // pred_region
      %967 = vsyncadd [#allocation9], 0
      %s969 = sshll.u32 [#allocation10], 4
      %s970 = int_to_ptr.vmem [resolvable:$true] %s969
      %s971 = sshll.u32 %s7, 4
      %s972 = int_to_ptr.hbm [resolvable:$true] %s971
      %974 = dma.vmem_to_hbm [thread:$0]  %s970, 64, %s972, [#allocation9]
    $region41: #{tpu_custom_call.1} parent=1 // pred_fallthru
      _
    // Predicated region
    $region42: #{tpu_custom_call.1} parent=1 // pred_check
      _
    $region43: #{tpu_custom_call.1} parent=1 // pred_check_branch
      %976 = sbr.rel (0) target = $region45
    $region44: #{tpu_custom_call.1} parent=1 // pred_region
      %978 = dma.done [#allocation3], 16
    $region45: #{tpu_custom_call.1} parent=1 // pred_fallthru
      _
    // Predicated region
    $region46: #{tpu_custom_call.1} parent=1 // pred_check
      _
    $region47: #{tpu_custom_call.1} parent=1 // pred_check_branch
      %980 = sbr.rel (0) target = $region49
    $region48: #{tpu_custom_call.1} parent=1 // pred_region
      %982 = dma.done [#allocation9], 64
    $region49: #{tpu_custom_call.1} parent=1 // pred_fallthru
      _
    // Predicated region
    $region50: #{tpu_custom_call.1} parent=1 // pred_check
      _
    $region51: #{tpu_custom_call.1} parent=1 // pred_check_branch
      %984 = sbr.rel (0) target = $region53
    $region52: #{tpu_custom_call.1} parent=1 // pred_region
      _
    $region53: #{tpu_custom_call.1} parent=1 // pred_fallthru
      _
    // Predicated region
    $region54: #{tpu_custom_call.1} parent=1 // pred_check
      _
    $region55: #{tpu_custom_call.1} parent=1 // pred_check_branch
      %986 = sbr.rel (0) target = $region57
    $region56: #{tpu_custom_call.1} parent=1 // pred_region
      %988 = dma.done [#allocation9], 64
    $region57: #{tpu_custom_call.1} parent=1 // pred_fallthru
      _
    %989 = vsyncpa [#allocation3], 1
    %990 = vsyncpa [#allocation9], 1
    %991 = vsyncpa [#allocation4], 1
    %992 = vsyncpa [#allocation6], 1

</llo_original>
